<compile_context>
chip_gen: v7x
topology: tpu7x:2x2x1
jax: 0.10.0
libtpu: 0.0.40
codegen_flags: <defaults>
</compile_context>

<pallas_src>
import functools
import math

import jax
import jax.numpy as jnp
from jax.experimental import pallas as pl
from jax.experimental.pallas import tpu as pltpu

D_MODEL = 32
D_FF = 64
N_HEAD = 4
HEAD_DIM = D_MODEL // N_HEAD
EPS = 1e-5


# ---------------- fused kernel (one grid step == one batch element) ----------

def _encoder_kernel(x_ref, mask_ref, wqkv_ref, bqkv_ref, wo_h_ref, bo_ref,
                    g1_ref, beta1_ref, w1_ref, b1_ref, w2_ref, b2_ref,
                    g2_ref, beta2_ref, o_ref):
    x = x_ref[0]                                   # (S, D)
    # additive mask built in-kernel: 0.0 where valid, -1e9 where masked
    mask_add = (mask_ref[0] - 1.0) * 1e9           # (1, S)

    # fused QKV projection: (S, D) x (D, 3D) -> (S, 3D)
    qkv = jnp.dot(x, wqkv_ref[...],
                  preferred_element_type=jnp.float32) + bqkv_ref[...]

    wo_heads = wo_h_ref[...]                       # (H, HD, D), loaded once
    scale = 1.0 / math.sqrt(HEAD_DIM)

    acc = jnp.zeros(x.shape, jnp.float32)          # (S, D) attention accumulator
    for h in range(N_HEAD):                        # static loop, H = 4
        q0 = h * HEAD_DIM
        k0 = D_MODEL + q0
        v0 = 2 * D_MODEL + q0
        qh = qkv[:, q0:q0 + HEAD_DIM]              # (S, HD)
        kh = qkv[:, k0:k0 + HEAD_DIM]
        vh = qkv[:, v0:v0 + HEAD_DIM]
        # scores: contract last dims of both operands (no explicit transpose)
        s = jax.lax.dot_general(
            qh, kh, (((1,), (1,)), ((), ())),
            preferred_element_type=jnp.float32) * scale      # (S, S)
        s = s + mask_add
        s = s - jnp.max(s, axis=-1, keepdims=True)
        p = jnp.exp(s)
        p = p * pl.reciprocal(jnp.sum(p, axis=-1, keepdims=True), approx=True)
        ctx = jnp.dot(p, vh, preferred_element_type=jnp.float32)       # (S, HD)
        # output projection decomposes as a sum over heads through the
        # pre-reshaped (H, HD, D) Wo -- cheap leading-axis index, no lane concat
        acc = acc + jnp.dot(ctx, wo_heads[h],
                            preferred_element_type=jnp.float32)
    attn_out = acc + bo_ref[...]                   # (S, D)

    # residual + LayerNorm 1
    y1 = x + attn_out
    mu1 = jnp.mean(y1, axis=-1, keepdims=True)
    var1 = jnp.mean(jnp.square(y1 - mu1), axis=-1, keepdims=True)
    y1n = (y1 - mu1) * jax.lax.rsqrt(var1 + EPS) * g1_ref[...] + beta1_ref[...]

    # FFN
    h_ff = jnp.maximum(
        jnp.dot(y1n, w1_ref[...], preferred_element_type=jnp.float32)
        + b1_ref[...], 0.0)
    ffn_out = jnp.dot(h_ff, w2_ref[...],
                      preferred_element_type=jnp.float32) + b2_ref[...]

    # residual + LayerNorm 2
    y2 = y1n + ffn_out
    mu2 = jnp.mean(y2, axis=-1, keepdims=True)
    var2 = jnp.mean(jnp.square(y2 - mu2), axis=-1, keepdims=True)
    o_ref[0] = (y2 - mu2) * jax.lax.rsqrt(var2 + EPS) * g2_ref[...] + beta2_ref[...]


# ---------------- wrapper ----------------

def encoder_layer(x, src_mask, params):
    B, S, D = x.shape
    assert D == D_MODEL

    def resident(shape):
        # weight / bias blocks: full array, same block every grid step
        return pl.BlockSpec(shape, lambda b: (0,) * len(shape))

    out = pl.pallas_call(
        _encoder_kernel,
        out_shape=jax.ShapeDtypeStruct((B, S, D), jnp.float32),
        grid=(B,),
        in_specs=[
            pl.BlockSpec((1, S, D), lambda b: (b, 0, 0)),          # x
            pl.BlockSpec((1, 1, S), lambda b: (b, 0, 0)),          # src_mask
            resident((D, 3 * D)),                                  # w_qkv
            resident((1, 3 * D)),                                  # b_qkv
            resident((N_HEAD, HEAD_DIM, D)),                       # wo_heads
            resident((1, D)),                                      # bo
            resident((1, D)), resident((1, D)),                    # ln1 g/b
            resident((D, D_FF)), resident((1, D_FF)),              # w1/b1
            resident((D_FF, D)), resident((1, D)),                 # w2/b2
            resident((1, D)), resident((1, D)),                    # ln2 g/b
        ],
        out_specs=pl.BlockSpec((1, S, D), lambda b: (b, 0, 0)),
        compiler_params=pltpu.CompilerParams(
            dimension_semantics=("parallel",),
            vmem_limit_bytes=32 * 1024 * 1024),
    )(x, src_mask,
      params["w_qkv"], params["b_qkv"], params["wo_heads"], params["bo"],
      params["ln1_g"], params["ln1_b"],
      params["w1"], params["b1"], params["w2"], params["b2"],
      params["ln2_g"], params["ln2_b"])

    return out


def init_params(key):
    ks = jax.random.split(key, 6)
    std = 0.02
    wq = std * jax.random.normal(ks[0], (D_MODEL, D_MODEL), jnp.float32)
    wk = std * jax.random.normal(ks[1], (D_MODEL, D_MODEL), jnp.float32)
    wv = std * jax.random.normal(ks[2], (D_MODEL, D_MODEL), jnp.float32)
    wo = std * jax.random.normal(ks[3], (D_MODEL, D_MODEL), jnp.float32)
    bq = jnp.zeros((1, D_MODEL), jnp.float32)
    bk = jnp.zeros((1, D_MODEL), jnp.float32)
    bv = jnp.zeros((1, D_MODEL), jnp.float32)
    return {
        # QKV packed ONCE here (not per forward call)
        "w_qkv": jnp.concatenate([wq, wk, wv], axis=1),            # (D, 3D)
        "b_qkv": jnp.concatenate([bq, bk, bv], axis=1),            # (1, 3D)
        # Wo pre-split into per-head row blocks: (H, HD, D)
        "wo_heads": wo.reshape(N_HEAD, HEAD_DIM, D_MODEL),
        "bo": jnp.zeros((1, D_MODEL), jnp.float32),
        "ln1_g": jnp.ones((1, D_MODEL), jnp.float32),
        "ln1_b": jnp.zeros((1, D_MODEL), jnp.float32),
        "w1": std * jax.random.normal(ks[4], (D_MODEL, D_FF), jnp.float32),
        "b1": jnp.zeros((1, D_FF), jnp.float32),
        "w2": std * jax.random.normal(ks[5], (D_FF, D_MODEL), jnp.float32),
        "b2": jnp.zeros((1, D_MODEL), jnp.float32),
        "ln2_g": jnp.ones((1, D_MODEL), jnp.float32),
        "ln2_b": jnp.zeros((1, D_MODEL), jnp.float32),
    }


if __name__ == "__main__":
    B, S = 2, 8
    key = jax.random.PRNGKey(0)
    k_x, k_p = jax.random.split(key)
    x = jax.random.normal(k_x, (B, S, D_MODEL), jnp.float32)
    # mask out the last two key positions of batch 1, keep all of batch 0
    src_mask = jnp.ones((B, 1, S), jnp.float32)
    src_mask = src_mask.at[1, 0, -2:].set(0.0)
    params = init_params(k_p)

    out = encoder_layer(x, src_mask, params)
    jax.block_until_ready(out)
    assert out.shape == (B, S, D_MODEL) and out.dtype == jnp.float32
    assert bool(jnp.all(jnp.isfinite(out)))
    print("KERNEL_OK")
</pallas_src>

<mosaic_0001>
module attributes {stable_mosaic.version = 11 : i64} {
  func.func @_encoder_kernel(%arg0: i32, %arg1: memref<1x8x32xf32, #tpu.memory_space<vmem>>, %arg2: memref<1x1x8xf32, #tpu.memory_space<vmem>>, %arg3: memref<32x96xf32, #tpu.memory_space<vmem>>, %arg4: memref<1x96xf32, #tpu.memory_space<vmem>>, %arg5: memref<4x8x32xf32, #tpu.memory_space<vmem>>, %arg6: memref<1x32xf32, #tpu.memory_space<vmem>>, %arg7: memref<1x32xf32, #tpu.memory_space<vmem>>, %arg8: memref<1x32xf32, #tpu.memory_space<vmem>>, %arg9: memref<32x64xf32, #tpu.memory_space<vmem>>, %arg10: memref<1x64xf32, #tpu.memory_space<vmem>>, %arg11: memref<64x32xf32, #tpu.memory_space<vmem>>, %arg12: memref<1x32xf32, #tpu.memory_space<vmem>>, %arg13: memref<1x32xf32, #tpu.memory_space<vmem>>, %arg14: memref<1x32xf32, #tpu.memory_space<vmem>>, %arg15: memref<1x8x32xf32, #tpu.memory_space<vmem>>) attributes {dimension_semantics = [#tpu.dimension_semantics<parallel>], iteration_bounds = array<i64: 2>, scalar_prefetch = 0 : i64, scratch_operands = 0 : i64, tpu.core_type = #tpu.core_type<tc>, window_params = [{transform_indices = @transform_0, window_bounds = array<i64: 1, 8, 32>}, {transform_indices = @transform_1, window_bounds = array<i64: 1, 1, 8>}, {pipeline_mode = #tpu.pipeline_mode<synchronous>, transform_indices = @transform_2, window_bounds = array<i64: 32, 96>}, {pipeline_mode = #tpu.pipeline_mode<synchronous>, transform_indices = @transform_3, window_bounds = array<i64: 1, 96>}, {pipeline_mode = #tpu.pipeline_mode<synchronous>, transform_indices = @transform_4, window_bounds = array<i64: 4, 8, 32>}, {pipeline_mode = #tpu.pipeline_mode<synchronous>, transform_indices = @transform_5, window_bounds = array<i64: 1, 32>}, {pipeline_mode = #tpu.pipeline_mode<synchronous>, transform_indices = @transform_6, window_bounds = array<i64: 1, 32>}, {pipeline_mode = #tpu.pipeline_mode<synchronous>, transform_indices = @transform_7, window_bounds = array<i64: 1, 32>}, {pipeline_mode = #tpu.pipeline_mode<synchronous>, transform_indices = @transform_8, window_bounds = array<i64: 32, 64>}, {pipeline_mode = #tpu.pipeline_mode<synchronous>, transform_indices = @transform_9, window_bounds = array<i64: 1, 64>}, {pipeline_mode = #tpu.pipeline_mode<synchronous>, transform_indices = @transform_10, window_bounds = array<i64: 64, 32>}, {pipeline_mode = #tpu.pipeline_mode<synchronous>, transform_indices = @transform_11, window_bounds = array<i64: 1, 32>}, {pipeline_mode = #tpu.pipeline_mode<synchronous>, transform_indices = @transform_12, window_bounds = array<i64: 1, 32>}, {pipeline_mode = #tpu.pipeline_mode<synchronous>, transform_indices = @transform_13, window_bounds = array<i64: 1, 32>}, {transform_indices = @transform_14, window_bounds = array<i64: 1, 8, 32>}]} {
    %c0 = arith.constant 0 : index
    %c0_0 = arith.constant 0 : index
    %c0_1 = arith.constant 0 : index
    %0 = vector.load %arg1[%c0, %c0_0, %c0_1] : memref<1x8x32xf32, #tpu.memory_space<vmem>>, vector<1x8x32xf32>
    %1 = vector.shape_cast %0 : vector<1x8x32xf32> to vector<8x32xf32>
    %c0_2 = arith.constant 0 : index
    %c0_3 = arith.constant 0 : index
    %c0_4 = arith.constant 0 : index
    %2 = vector.load %arg2[%c0_2, %c0_3, %c0_4] : memref<1x1x8xf32, #tpu.memory_space<vmem>>, vector<1x1x8xf32>
    %3 = vector.shape_cast %2 : vector<1x1x8xf32> to vector<1x8xf32>
    %cst = arith.constant 1.000000e+00 : f32
    %4 = vector.broadcast %cst : f32 to vector<1x8xf32>
    %5 = arith.subf %3, %4 : vector<1x8xf32>
    %cst_5 = arith.constant 1.000000e+09 : f32
    %6 = vector.broadcast %cst_5 : f32 to vector<1x8xf32>
    %7 = arith.mulf %5, %6 : vector<1x8xf32>
    %c0_6 = arith.constant 0 : index
    %c0_7 = arith.constant 0 : index
    %8 = vector.load %arg3[%c0_6, %c0_7] : memref<32x96xf32, #tpu.memory_space<vmem>>, vector<32x96xf32>
    %cst_8 = arith.constant dense<0.000000e+00> : vector<8x96xf32>
    %9 = tpu.matmul %1, %8, %cst_8 {dimension_numbers = #tpu.dot_dimension_numbers<[1], [0], [0], [1], [0, 0, 1, 1], [], []>} : vector<8x32xf32>, vector<32x96xf32>, vector<8x96xf32> -> vector<8x96xf32>
    %c0_9 = arith.constant 0 : index
    %c0_10 = arith.constant 0 : index
    %10 = vector.load %arg4[%c0_9, %c0_10] : memref<1x96xf32, #tpu.memory_space<vmem>>, vector<1x96xf32>
    %11 = vector.broadcast %10 : vector<1x96xf32> to vector<8x96xf32>
    %12 = arith.addf %9, %11 : vector<8x96xf32>
    %c0_11 = arith.constant 0 : index
    %c0_12 = arith.constant 0 : index
    %c0_13 = arith.constant 0 : index
    %13 = vector.load %arg5[%c0_11, %c0_12, %c0_13] : memref<4x8x32xf32, #tpu.memory_space<vmem>>, vector<4x8x32xf32>
    %cst_14 = arith.constant 0.000000e+00 : f32
    %14 = vector.broadcast %cst_14 : f32 to vector<8x32xf32>
    %15 = vector.extract_strided_slice %12 {offsets = [0, 0], sizes = [8, 8], strides = [1, 1]} : vector<8x96xf32> to vector<8x8xf32>
    %16 = vector.extract_strided_slice %12 {offsets = [0, 32], sizes = [8, 8], strides = [1, 1]} : vector<8x96xf32> to vector<8x8xf32>
    %17 = vector.extract_strided_slice %12 {offsets = [0, 64], sizes = [8, 8], strides = [1, 1]} : vector<8x96xf32> to vector<8x8xf32>
    %cst_15 = arith.constant dense<0.000000e+00> : vector<8x8xf32>
    %18 = tpu.matmul %15, %16, %cst_15 {dimension_numbers = #tpu.dot_dimension_numbers<[1], [1], [0], [0], [0, 0, 1, 0], [], []>} : vector<8x8xf32>, vector<8x8xf32>, vector<8x8xf32> -> vector<8x8xf32>
    %cst_16 = arith.constant 0.353553385 : f32
    %19 = vector.broadcast %cst_16 : f32 to vector<8x8xf32>
    %20 = arith.mulf %18, %19 : vector<8x8xf32>
    %21 = vector.broadcast %7 : vector<1x8xf32> to vector<8x8xf32>
    %22 = arith.addf %20, %21 : vector<8x8xf32>
    %cst_17 = arith.constant dense<0xFF800000> : vector<8xf32>
    %23 = vector.multi_reduction <maximumf>, %22, %cst_17 [1] : vector<8x8xf32> to vector<8xf32>
    %24 = vector.shape_cast %23 : vector<8xf32> to vector<8x1xf32>
    %25 = vector.broadcast %24 : vector<8x1xf32> to vector<8x8xf32>
    %26 = arith.subf %22, %25 : vector<8x8xf32>
    %27 = math.exp %26 : vector<8x8xf32>
    %cst_18 = arith.constant dense<0.000000e+00> : vector<8xf32>
    %28 = vector.multi_reduction <add>, %27, %cst_18 [1] : vector<8x8xf32> to vector<8xf32>
    %29 = vector.shape_cast %28 : vector<8xf32> to vector<8x1xf32>
    %30 = tpu.reciprocal %29 {approx = true} : vector<8x1xf32> -> vector<8x1xf32>
    %31 = vector.broadcast %30 : vector<8x1xf32> to vector<8x8xf32>
    %32 = arith.mulf %27, %31 : vector<8x8xf32>
    %cst_19 = arith.constant dense<0.000000e+00> : vector<8x8xf32>
    %33 = tpu.matmul %32, %17, %cst_19 {dimension_numbers = #tpu.dot_dimension_numbers<[1], [0], [0], [1], [0, 0, 1, 1], [], []>} : vector<8x8xf32>, vector<8x8xf32>, vector<8x8xf32> -> vector<8x8xf32>
    %34 = vector.extract_strided_slice %13 {offsets = [0, 0, 0], sizes = [1, 8, 32], strides = [1, 1, 1]} : vector<4x8x32xf32> to vector<1x8x32xf32>
    %35 = vector.shape_cast %34 : vector<1x8x32xf32> to vector<8x32xf32>
    %cst_20 = arith.constant dense<0.000000e+00> : vector<8x32xf32>
    %36 = tpu.matmul %33, %35, %cst_20 {dimension_numbers = #tpu.dot_dimension_numbers<[1], [0], [0], [1], [0, 0, 1, 1], [], []>} : vector<8x8xf32>, vector<8x32xf32>, vector<8x32xf32> -> vector<8x32xf32>
    %37 = arith.addf %14, %36 : vector<8x32xf32>
    %38 = vector.extract_strided_slice %12 {offsets = [0, 8], sizes = [8, 8], strides = [1, 1]} : vector<8x96xf32> to vector<8x8xf32>
    %39 = vector.extract_strided_slice %12 {offsets = [0, 40], sizes = [8, 8], strides = [1, 1]} : vector<8x96xf32> to vector<8x8xf32>
    %40 = vector.extract_strided_slice %12 {offsets = [0, 72], sizes = [8, 8], strides = [1, 1]} : vector<8x96xf32> to vector<8x8xf32>
    %cst_21 = arith.constant dense<0.000000e+00> : vector<8x8xf32>
    %41 = tpu.matmul %38, %39, %cst_21 {dimension_numbers = #tpu.dot_dimension_numbers<[1], [1], [0], [0], [0, 0, 1, 0], [], []>} : vector<8x8xf32>, vector<8x8xf32>, vector<8x8xf32> -> vector<8x8xf32>
    %cst_22 = arith.constant 0.353553385 : f32
    %42 = vector.broadcast %cst_22 : f32 to vector<8x8xf32>
    %43 = arith.mulf %41, %42 : vector<8x8xf32>
    %44 = vector.broadcast %7 : vector<1x8xf32> to vector<8x8xf32>
    %45 = arith.addf %43, %44 : vector<8x8xf32>
    %cst_23 = arith.constant dense<0xFF800000> : vector<8xf32>
    %46 = vector.multi_reduction <maximumf>, %45, %cst_23 [1] : vector<8x8xf32> to vector<8xf32>
    %47 = vector.shape_cast %46 : vector<8xf32> to vector<8x1xf32>
    %48 = vector.broadcast %47 : vector<8x1xf32> to vector<8x8xf32>
    %49 = arith.subf %45, %48 : vector<8x8xf32>
    %50 = math.exp %49 : vector<8x8xf32>
    %cst_24 = arith.constant dense<0.000000e+00> : vector<8xf32>
    %51 = vector.multi_reduction <add>, %50, %cst_24 [1] : vector<8x8xf32> to vector<8xf32>
    %52 = vector.shape_cast %51 : vector<8xf32> to vector<8x1xf32>
    %53 = tpu.reciprocal %52 {approx = true} : vector<8x1xf32> -> vector<8x1xf32>
    %54 = vector.broadcast %53 : vector<8x1xf32> to vector<8x8xf32>
    %55 = arith.mulf %50, %54 : vector<8x8xf32>
    %cst_25 = arith.constant dense<0.000000e+00> : vector<8x8xf32>
    %56 = tpu.matmul %55, %40, %cst_25 {dimension_numbers = #tpu.dot_dimension_numbers<[1], [0], [0], [1], [0, 0, 1, 1], [], []>} : vector<8x8xf32>, vector<8x8xf32>, vector<8x8xf32> -> vector<8x8xf32>
    %57 = vector.extract_strided_slice %13 {offsets = [1, 0, 0], sizes = [1, 8, 32], strides = [1, 1, 1]} : vector<4x8x32xf32> to vector<1x8x32xf32>
    %58 = vector.shape_cast %57 : vector<1x8x32xf32> to vector<8x32xf32>
    %cst_26 = arith.constant dense<0.000000e+00> : vector<8x32xf32>
    %59 = tpu.matmul %56, %58, %cst_26 {dimension_numbers = #tpu.dot_dimension_numbers<[1], [0], [0], [1], [0, 0, 1, 1], [], []>} : vector<8x8xf32>, vector<8x32xf32>, vector<8x32xf32> -> vector<8x32xf32>
    %60 = arith.addf %37, %59 : vector<8x32xf32>
    %61 = vector.extract_strided_slice %12 {offsets = [0, 16], sizes = [8, 8], strides = [1, 1]} : vector<8x96xf32> to vector<8x8xf32>
    %62 = vector.extract_strided_slice %12 {offsets = [0, 48], sizes = [8, 8], strides = [1, 1]} : vector<8x96xf32> to vector<8x8xf32>
    %63 = vector.extract_strided_slice %12 {offsets = [0, 80], sizes = [8, 8], strides = [1, 1]} : vector<8x96xf32> to vector<8x8xf32>
    %cst_27 = arith.constant dense<0.000000e+00> : vector<8x8xf32>
    %64 = tpu.matmul %61, %62, %cst_27 {dimension_numbers = #tpu.dot_dimension_numbers<[1], [1], [0], [0], [0, 0, 1, 0], [], []>} : vector<8x8xf32>, vector<8x8xf32>, vector<8x8xf32> -> vector<8x8xf32>
    %cst_28 = arith.constant 0.353553385 : f32
    %65 = vector.broadcast %cst_28 : f32 to vector<8x8xf32>
    %66 = arith.mulf %64, %65 : vector<8x8xf32>
    %67 = vector.broadcast %7 : vector<1x8xf32> to vector<8x8xf32>
    %68 = arith.addf %66, %67 : vector<8x8xf32>
    %cst_29 = arith.constant dense<0xFF800000> : vector<8xf32>
    %69 = vector.multi_reduction <maximumf>, %68, %cst_29 [1] : vector<8x8xf32> to vector<8xf32>
    %70 = vector.shape_cast %69 : vector<8xf32> to vector<8x1xf32>
    %71 = vector.broadcast %70 : vector<8x1xf32> to vector<8x8xf32>
    %72 = arith.subf %68, %71 : vector<8x8xf32>
    %73 = math.exp %72 : vector<8x8xf32>
    %cst_30 = arith.constant dense<0.000000e+00> : vector<8xf32>
    %74 = vector.multi_reduction <add>, %73, %cst_30 [1] : vector<8x8xf32> to vector<8xf32>
    %75 = vector.shape_cast %74 : vector<8xf32> to vector<8x1xf32>
    %76 = tpu.reciprocal %75 {approx = true} : vector<8x1xf32> -> vector<8x1xf32>
    %77 = vector.broadcast %76 : vector<8x1xf32> to vector<8x8xf32>
    %78 = arith.mulf %73, %77 : vector<8x8xf32>
    %cst_31 = arith.constant dense<0.000000e+00> : vector<8x8xf32>
    %79 = tpu.matmul %78, %63, %cst_31 {dimension_numbers = #tpu.dot_dimension_numbers<[1], [0], [0], [1], [0, 0, 1, 1], [], []>} : vector<8x8xf32>, vector<8x8xf32>, vector<8x8xf32> -> vector<8x8xf32>
    %80 = vector.extract_strided_slice %13 {offsets = [2, 0, 0], sizes = [1, 8, 32], strides = [1, 1, 1]} : vector<4x8x32xf32> to vector<1x8x32xf32>
    %81 = vector.shape_cast %80 : vector<1x8x32xf32> to vector<8x32xf32>
    %cst_32 = arith.constant dense<0.000000e+00> : vector<8x32xf32>
    %82 = tpu.matmul %79, %81, %cst_32 {dimension_numbers = #tpu.dot_dimension_numbers<[1], [0], [0], [1], [0, 0, 1, 1], [], []>} : vector<8x8xf32>, vector<8x32xf32>, vector<8x32xf32> -> vector<8x32xf32>
    %83 = arith.addf %60, %82 : vector<8x32xf32>
    %84 = vector.extract_strided_slice %12 {offsets = [0, 24], sizes = [8, 8], strides = [1, 1]} : vector<8x96xf32> to vector<8x8xf32>
    %85 = vector.extract_strided_slice %12 {offsets = [0, 56], sizes = [8, 8], strides = [1, 1]} : vector<8x96xf32> to vector<8x8xf32>
    %86 = vector.extract_strided_slice %12 {offsets = [0, 88], sizes = [8, 8], strides = [1, 1]} : vector<8x96xf32> to vector<8x8xf32>
    %cst_33 = arith.constant dense<0.000000e+00> : vector<8x8xf32>
    %87 = tpu.matmul %84, %85, %cst_33 {dimension_numbers = #tpu.dot_dimension_numbers<[1], [1], [0], [0], [0, 0, 1, 0], [], []>} : vector<8x8xf32>, vector<8x8xf32>, vector<8x8xf32> -> vector<8x8xf32>
    %cst_34 = arith.constant 0.353553385 : f32
    %88 = vector.broadcast %cst_34 : f32 to vector<8x8xf32>
    %89 = arith.mulf %87, %88 : vector<8x8xf32>
    %90 = vector.broadcast %7 : vector<1x8xf32> to vector<8x8xf32>
    %91 = arith.addf %89, %90 : vector<8x8xf32>
    %cst_35 = arith.constant dense<0xFF800000> : vector<8xf32>
    %92 = vector.multi_reduction <maximumf>, %91, %cst_35 [1] : vector<8x8xf32> to vector<8xf32>
    %93 = vector.shape_cast %92 : vector<8xf32> to vector<8x1xf32>
    %94 = vector.broadcast %93 : vector<8x1xf32> to vector<8x8xf32>
    %95 = arith.subf %91, %94 : vector<8x8xf32>
    %96 = math.exp %95 : vector<8x8xf32>
    %cst_36 = arith.constant dense<0.000000e+00> : vector<8xf32>
    %97 = vector.multi_reduction <add>, %96, %cst_36 [1] : vector<8x8xf32> to vector<8xf32>
    %98 = vector.shape_cast %97 : vector<8xf32> to vector<8x1xf32>
    %99 = tpu.reciprocal %98 {approx = true} : vector<8x1xf32> -> vector<8x1xf32>
    %100 = vector.broadcast %99 : vector<8x1xf32> to vector<8x8xf32>
    %101 = arith.mulf %96, %100 : vector<8x8xf32>
    %cst_37 = arith.constant dense<0.000000e+00> : vector<8x8xf32>
    %102 = tpu.matmul %101, %86, %cst_37 {dimension_numbers = #tpu.dot_dimension_numbers<[1], [0], [0], [1], [0, 0, 1, 1], [], []>} : vector<8x8xf32>, vector<8x8xf32>, vector<8x8xf32> -> vector<8x8xf32>
    %103 = vector.extract_strided_slice %13 {offsets = [3, 0, 0], sizes = [1, 8, 32], strides = [1, 1, 1]} : vector<4x8x32xf32> to vector<1x8x32xf32>
    %104 = vector.shape_cast %103 : vector<1x8x32xf32> to vector<8x32xf32>
    %cst_38 = arith.constant dense<0.000000e+00> : vector<8x32xf32>
    %105 = tpu.matmul %102, %104, %cst_38 {dimension_numbers = #tpu.dot_dimension_numbers<[1], [0], [0], [1], [0, 0, 1, 1], [], []>} : vector<8x8xf32>, vector<8x32xf32>, vector<8x32xf32> -> vector<8x32xf32>
    %106 = arith.addf %83, %105 : vector<8x32xf32>
    %c0_39 = arith.constant 0 : index
    %c0_40 = arith.constant 0 : index
    %107 = vector.load %arg6[%c0_39, %c0_40] : memref<1x32xf32, #tpu.memory_space<vmem>>, vector<1x32xf32>
    %108 = vector.broadcast %107 : vector<1x32xf32> to vector<8x32xf32>
    %109 = arith.addf %106, %108 : vector<8x32xf32>
    %110 = arith.addf %1, %109 : vector<8x32xf32>
    %cst_41 = arith.constant dense<0.000000e+00> : vector<8xf32>
    %111 = vector.multi_reduction <add>, %110, %cst_41 [1] : vector<8x32xf32> to vector<8xf32>
    %112 = vector.shape_cast %111 : vector<8xf32> to vector<8x1xf32>
    %cst_42 = arith.constant 3.200000e+01 : f32
    %113 = vector.broadcast %cst_42 : f32 to vector<8x1xf32>
    %114 = arith.divf %112, %113 : vector<8x1xf32>
    %115 = vector.broadcast %114 : vector<8x1xf32> to vector<8x32xf32>
    %116 = arith.subf %110, %115 : vector<8x32xf32>
    %117 = arith.mulf %116, %116 : vector<8x32xf32>
    %cst_43 = arith.constant dense<0.000000e+00> : vector<8xf32>
    %118 = vector.multi_reduction <add>, %117, %cst_43 [1] : vector<8x32xf32> to vector<8xf32>
    %119 = vector.shape_cast %118 : vector<8xf32> to vector<8x1xf32>
    %cst_44 = arith.constant 3.200000e+01 : f32
    %120 = vector.broadcast %cst_44 : f32 to vector<8x1xf32>
    %121 = arith.divf %119, %120 : vector<8x1xf32>
    %122 = vector.broadcast %114 : vector<8x1xf32> to vector<8x32xf32>
    %123 = arith.subf %110, %122 : vector<8x32xf32>
    %cst_45 = arith.constant 9.99999974E-6 : f32
    %124 = vector.broadcast %cst_45 : f32 to vector<8x1xf32>
    %125 = arith.addf %121, %124 : vector<8x1xf32>
    %126 = math.rsqrt %125 : vector<8x1xf32>
    %127 = vector.broadcast %126 : vector<8x1xf32> to vector<8x32xf32>
    %128 = arith.mulf %123, %127 : vector<8x32xf32>
    %c0_46 = arith.constant 0 : index
    %c0_47 = arith.constant 0 : index
    %129 = vector.load %arg7[%c0_46, %c0_47] : memref<1x32xf32, #tpu.memory_space<vmem>>, vector<1x32xf32>
    %130 = vector.broadcast %129 : vector<1x32xf32> to vector<8x32xf32>
    %131 = arith.mulf %128, %130 : vector<8x32xf32>
    %c0_48 = arith.constant 0 : index
    %c0_49 = arith.constant 0 : index
    %132 = vector.load %arg8[%c0_48, %c0_49] : memref<1x32xf32, #tpu.memory_space<vmem>>, vector<1x32xf32>
    %133 = vector.broadcast %132 : vector<1x32xf32> to vector<8x32xf32>
    %134 = arith.addf %131, %133 : vector<8x32xf32>
    %c0_50 = arith.constant 0 : index
    %c0_51 = arith.constant 0 : index
    %135 = vector.load %arg9[%c0_50, %c0_51] : memref<32x64xf32, #tpu.memory_space<vmem>>, vector<32x64xf32>
    %cst_52 = arith.constant dense<0.000000e+00> : vector<8x64xf32>
    %136 = tpu.matmul %134, %135, %cst_52 {dimension_numbers = #tpu.dot_dimension_numbers<[1], [0], [0], [1], [0, 0, 1, 1], [], []>} : vector<8x32xf32>, vector<32x64xf32>, vector<8x64xf32> -> vector<8x64xf32>
    %c0_53 = arith.constant 0 : index
    %c0_54 = arith.constant 0 : index
    %137 = vector.load %arg10[%c0_53, %c0_54] : memref<1x64xf32, #tpu.memory_space<vmem>>, vector<1x64xf32>
    %138 = vector.broadcast %137 : vector<1x64xf32> to vector<8x64xf32>
    %139 = arith.addf %136, %138 : vector<8x64xf32>
    %cst_55 = arith.constant 0.000000e+00 : f32
    %140 = vector.broadcast %cst_55 : f32 to vector<8x64xf32>
    %141 = arith.maximumf %139, %140 : vector<8x64xf32>
    %c0_56 = arith.constant 0 : index
    %c0_57 = arith.constant 0 : index
    %142 = vector.load %arg11[%c0_56, %c0_57] : memref<64x32xf32, #tpu.memory_space<vmem>>, vector<64x32xf32>
    %cst_58 = arith.constant dense<0.000000e+00> : vector<8x32xf32>
    %143 = tpu.matmul %141, %142, %cst_58 {dimension_numbers = #tpu.dot_dimension_numbers<[1], [0], [0], [1], [0, 0, 1, 1], [], []>} : vector<8x64xf32>, vector<64x32xf32>, vector<8x32xf32> -> vector<8x32xf32>
    %c0_59 = arith.constant 0 : index
    %c0_60 = arith.constant 0 : index
    %144 = vector.load %arg12[%c0_59, %c0_60] : memref<1x32xf32, #tpu.memory_space<vmem>>, vector<1x32xf32>
    %145 = vector.broadcast %144 : vector<1x32xf32> to vector<8x32xf32>
    %146 = arith.addf %143, %145 : vector<8x32xf32>
    %147 = arith.addf %134, %146 : vector<8x32xf32>
    %cst_61 = arith.constant dense<0.000000e+00> : vector<8xf32>
    %148 = vector.multi_reduction <add>, %147, %cst_61 [1] : vector<8x32xf32> to vector<8xf32>
    %149 = vector.shape_cast %148 : vector<8xf32> to vector<8x1xf32>
    %cst_62 = arith.constant 3.200000e+01 : f32
    %150 = vector.broadcast %cst_62 : f32 to vector<8x1xf32>
    %151 = arith.divf %149, %150 : vector<8x1xf32>
    %152 = vector.broadcast %151 : vector<8x1xf32> to vector<8x32xf32>
    %153 = arith.subf %147, %152 : vector<8x32xf32>
    %154 = arith.mulf %153, %153 : vector<8x32xf32>
    %cst_63 = arith.constant dense<0.000000e+00> : vector<8xf32>
    %155 = vector.multi_reduction <add>, %154, %cst_63 [1] : vector<8x32xf32> to vector<8xf32>
    %156 = vector.shape_cast %155 : vector<8xf32> to vector<8x1xf32>
    %cst_64 = arith.constant 3.200000e+01 : f32
    %157 = vector.broadcast %cst_64 : f32 to vector<8x1xf32>
    %158 = arith.divf %156, %157 : vector<8x1xf32>
    %159 = vector.broadcast %151 : vector<8x1xf32> to vector<8x32xf32>
    %160 = arith.subf %147, %159 : vector<8x32xf32>
    %cst_65 = arith.constant 9.99999974E-6 : f32
    %161 = vector.broadcast %cst_65 : f32 to vector<8x1xf32>
    %162 = arith.addf %158, %161 : vector<8x1xf32>
    %163 = math.rsqrt %162 : vector<8x1xf32>
    %164 = vector.broadcast %163 : vector<8x1xf32> to vector<8x32xf32>
    %165 = arith.mulf %160, %164 : vector<8x32xf32>
    %c0_66 = arith.constant 0 : index
    %c0_67 = arith.constant 0 : index
    %166 = vector.load %arg13[%c0_66, %c0_67] : memref<1x32xf32, #tpu.memory_space<vmem>>, vector<1x32xf32>
    %167 = vector.broadcast %166 : vector<1x32xf32> to vector<8x32xf32>
    %168 = arith.mulf %165, %167 : vector<8x32xf32>
    %c0_68 = arith.constant 0 : index
    %c0_69 = arith.constant 0 : index
    %169 = vector.load %arg14[%c0_68, %c0_69] : memref<1x32xf32, #tpu.memory_space<vmem>>, vector<1x32xf32>
    %170 = vector.broadcast %169 : vector<1x32xf32> to vector<8x32xf32>
    %171 = arith.addf %168, %170 : vector<8x32xf32>
    %c0_70 = arith.constant 0 : index
    %c0_71 = arith.constant 0 : index
    %c0_72 = arith.constant 0 : index
    %172 = vector.load %arg15[%c0_70, %c0_71, %c0_72] : memref<1x8x32xf32, #tpu.memory_space<vmem>>, vector<1x8x32xf32>
    %173 = vector.shape_cast %172 : vector<1x8x32xf32> to vector<8x32xf32>
    %174 = vector.shape_cast %171 : vector<8x32xf32> to vector<1x8x32xf32>
    tpu.vector_store %arg15[%c0_70, %c0_71, %c0_72], %174 {strides = array<i32>} : memref<1x8x32xf32, #tpu.memory_space<vmem>>, vector<1x8x32xf32>,
    return
  }
  func.func @transform_0(%arg0: i32) -> (i32, i32, i32) {
    %c0_i32 = arith.constant 0 : i32
    %c0_i32_0 = arith.constant 0 : i32
    %c0_i32_1 = arith.constant 0 : i32
    return %arg0, %c0_i32, %c0_i32_0 : i32, i32, i32
  }
  func.func @transform_1(%arg0: i32) -> (i32, i32, i32) {
    %c0_i32 = arith.constant 0 : i32
    %c0_i32_0 = arith.constant 0 : i32
    %c0_i32_1 = arith.constant 0 : i32
    return %arg0, %c0_i32, %c0_i32_0 : i32, i32, i32
  }
  func.func @transform_2(%arg0: i32) -> (i32, i32) {
    %c0_i32 = arith.constant 0 : i32
    %c0_i32_0 = arith.constant 0 : i32
    %c0_i32_1 = arith.constant 0 : i32
    return %c0_i32, %c0_i32_0 : i32, i32
  }
  func.func @transform_3(%arg0: i32) -> (i32, i32) {
    %c0_i32 = arith.constant 0 : i32
    %c0_i32_0 = arith.constant 0 : i32
    %c0_i32_1 = arith.constant 0 : i32
    return %c0_i32, %c0_i32_0 : i32, i32
  }
  func.func @transform_4(%arg0: i32) -> (i32, i32, i32) {
    %c0_i32 = arith.constant 0 : i32
    %c0_i32_0 = arith.constant 0 : i32
    %c0_i32_1 = arith.constant 0 : i32
    %c0_i32_2 = arith.constant 0 : i32
    return %c0_i32, %c0_i32_0, %c0_i32_1 : i32, i32, i32
  }
  func.func @transform_5(%arg0: i32) -> (i32, i32) {
    %c0_i32 = arith.constant 0 : i32
    %c0_i32_0 = arith.constant 0 : i32
    %c0_i32_1 = arith.constant 0 : i32
    return %c0_i32, %c0_i32_0 : i32, i32
  }
  func.func @transform_6(%arg0: i32) -> (i32, i32) {
    %c0_i32 = arith.constant 0 : i32
    %c0_i32_0 = arith.constant 0 : i32
    %c0_i32_1 = arith.constant 0 : i32
    return %c0_i32, %c0_i32_0 : i32, i32
  }
  func.func @transform_7(%arg0: i32) -> (i32, i32) {
    %c0_i32 = arith.constant 0 : i32
    %c0_i32_0 = arith.constant 0 : i32
    %c0_i32_1 = arith.constant 0 : i32
    return %c0_i32, %c0_i32_0 : i32, i32
  }
  func.func @transform_8(%arg0: i32) -> (i32, i32) {
    %c0_i32 = arith.constant 0 : i32
    %c0_i32_0 = arith.constant 0 : i32
    %c0_i32_1 = arith.constant 0 : i32
    return %c0_i32, %c0_i32_0 : i32, i32
  }
  func.func @transform_9(%arg0: i32) -> (i32, i32) {
    %c0_i32 = arith.constant 0 : i32
    %c0_i32_0 = arith.constant 0 : i32
    %c0_i32_1 = arith.constant 0 : i32
    return %c0_i32, %c0_i32_0 : i32, i32
  }
  func.func @transform_10(%arg0: i32) -> (i32, i32) {
    %c0_i32 = arith.constant 0 : i32
    %c0_i32_0 = arith.constant 0 : i32
    %c0_i32_1 = arith.constant 0 : i32
    return %c0_i32, %c0_i32_0 : i32, i32
  }
  func.func @transform_11(%arg0: i32) -> (i32, i32) {
    %c0_i32 = arith.constant 0 : i32
    %c0_i32_0 = arith.constant 0 : i32
    %c0_i32_1 = arith.constant 0 : i32
    return %c0_i32, %c0_i32_0 : i32, i32
  }
  func.func @transform_12(%arg0: i32) -> (i32, i32) {
    %c0_i32 = arith.constant 0 : i32
    %c0_i32_0 = arith.constant 0 : i32
    %c0_i32_1 = arith.constant 0 : i32
    return %c0_i32, %c0_i32_0 : i32, i32
  }
  func.func @transform_13(%arg0: i32) -> (i32, i32) {
    %c0_i32 = arith.constant 0 : i32
    %c0_i32_0 = arith.constant 0 : i32
    %c0_i32_1 = arith.constant 0 : i32
    return %c0_i32, %c0_i32_0 : i32, i32
  }
  func.func @transform_14(%arg0: i32) -> (i32, i32, i32) {
    %c0_i32 = arith.constant 0 : i32
    %c0_i32_0 = arith.constant 0 : i32
    %c0_i32_1 = arith.constant 0 : i32
    return %arg0, %c0_i32, %c0_i32_0 : i32, i32, i32
  }
}

</mosaic_0001>

<llo_original>
// kernel: tpu_custom_call.1
$region0: #{tpu_custom_call.1}
  #allocation0 [shape = 'u32[]', space=smem, size = 0x4, offset = 0x4, fixed_abs, tag = 'smem constant byte address 0x4 - core index']
  #allocation1 [shape = 'u32[144,128]{1,0:T(1,128)}', space=vmem, size = 0x12000, scoped, tag = 'internal scratch']
  %s0 = inlined_call_operand.hbm [shape: f32[2,8,32], index: 0, kind: input, shape index: {}]
  %s1 = inlined_call_operand.vmem [shape: f32[2,1,8], index: 1, kind: input, shape index: {}]
  %s2 = inlined_call_operand.vmem [shape: f32[32,96], index: 2, kind: input, shape index: {}]
  %s3 = inlined_call_operand.vmem [shape: f32[1,96], index: 3, kind: input, shape index: {}]
  %s4 = inlined_call_operand.vmem [shape: f32[4,8,32], index: 4, kind: input, shape index: {}]
  %s5 = inlined_call_operand.vmem [shape: f32[1,32], index: 5, kind: input, shape index: {}]
  %s6 = inlined_call_operand.vmem [shape: f32[1,32], index: 6, kind: input, shape index: {}]
  %s7 = inlined_call_operand.hbm [shape: f32[1,32], index: 7, kind: input, shape index: {}]
  %s8 = inlined_call_operand.vmem [shape: f32[32,64], index: 8, kind: input, shape index: {}]
  %s9 = inlined_call_operand.hbm [shape: f32[1,64], index: 9, kind: input, shape index: {}]
  %s10 = inlined_call_operand.vmem [shape: f32[64,32], index: 10, kind: input, shape index: {}]
  %s11 = inlined_call_operand.vmem [shape: f32[1,32], index: 11, kind: input, shape index: {}]
  %s12 = inlined_call_operand.vmem [shape: f32[1,32], index: 12, kind: input, shape index: {}]
  %s13 = inlined_call_operand.vmem [shape: f32[1,32], index: 13, kind: input, shape index: {}]
  %s14 = inlined_call_operand.hbm [shape: f32[2,8,32], index: 14, kind: output, shape index: {}]
  %s15 = sld [smem:[#allocation0]]
  $region101: #{tpu_custom_call.1} parent=0
    _
  %s17 = ssub.s32 1, %s15
  %s18 = scalar_select 0, %s17, %s15
  $region1: #{tpu_custom_call.1} parent=0
    #allocation2 [shape = 'u8[8192]{0}', space=vmem, size = 0x2000, scoped, tag = 'input window, operand 0']
    #allocation3 [shape = 's32[2]{0}', space=sflag, size = 0x8, scoped, tag = 'scoped memory for tpu_custom_call.1']
    #allocation4 [shape = 's32[2]{0}', space=sflag, size = 0x8, scoped, tag = 'scoped memory for tpu_custom_call.1']
    #allocation5 [shape = 'u8[512]{0}', space=vmem, size = 0x400, scoped, tag = 'input window, operand 7, single buffered']
    #allocation6 [shape = 's32[1]{0}', space=sflag, size = 0x4, scoped, tag = 'scoped memory for tpu_custom_call.1']
    #allocation7 [shape = 'u8[512]{0}', space=vmem, size = 0x400, scoped, tag = 'input window, operand 9, single buffered']
    #allocation8 [shape = 'u8[8192]{0}', space=vmem, size = 0x2000, scoped, tag = 'output window, operand 0']
    %19 = vsyncpa [#allocation3], 0
    %s20 = scalar_lea.sflag [#allocation3], 1
    %21 = vsyncpa %s20, 0
    %22 = vsyncpa [#allocation6], 0
    %23 = vsyncpa [#allocation4], 0
    %s24 = scalar_lea.sflag [#allocation4], 1
    %25 = vsyncpa %s24, 0
    loop: start=0, step=1, limit=4
    $region2: #{tpu_custom_call.1} parent=1 // loop_pre_header
      _
    $region3: #{tpu_custom_call.1} parent=1 // loop_header
      %s27 = sphi 0, %s31
      %p28 = scmp.ge.s32.totalorder %s27, 4
      %s37 = sphi 0, %s39
      %s40 = sphi 0, %s37
      %s41 = sphi 0, %s40
      %s57 = sphi 0, %s41
      %s63 = sphi 0, %s65
      %s66 = sphi 0, %s63
      %s67 = sphi 0, %s66
      %s83 = sphi 0, %s67
      %s87 = sphi 0, %s87
      %s89 = sphi 0, %s87
      %s90 = sphi 0, %s89
      %s104 = sphi 0, %s90
      %s108 = sphi 0, %s108
      %s110 = sphi 0, %s108
      %s111 = sphi 0, %s110
      %s125 = sphi 0, %s111
      %s129 = sphi 0, %s129
      %s131 = sphi 0, %s129
      %s132 = sphi 0, %s131
      %s146 = sphi 0, %s132
      %s150 = sphi 0, %s150
      %s152 = sphi 0, %s150
      %s153 = sphi 0, %s152
      %s167 = sphi 0, %s153
      %s171 = sphi 0, %s171
      %s173 = sphi 0, %s171
      %s174 = sphi 0, %s173
      %s188 = sphi 0, %s174
      %s192 = sphi 0, %s192
      %s194 = sphi 0, %s192
      %s195 = sphi 0, %s194
      %s209 = sphi 0, %s195
      %s213 = sphi 0, %s213
      %s215 = sphi 0, %s213
      %s216 = sphi 0, %s215
      %s230 = sphi 0, %s216
      %s234 = sphi 0, %s234
      %s236 = sphi 0, %s234
      %s237 = sphi 0, %s236
      %s251 = sphi 0, %s237
      %s255 = sphi 0, %s255
      %s257 = sphi 0, %s255
      %s258 = sphi 0, %s257
      %s272 = sphi 0, %s258
      %s276 = sphi 0, %s276
      %s278 = sphi 0, %s276
      %s279 = sphi 0, %s278
      %s293 = sphi 0, %s279
      %s297 = sphi 0, %s297
      %s299 = sphi 0, %s297
      %s300 = sphi 0, %s299
      %s314 = sphi 0, %s300
      %s318 = sphi 0, %s318
      %s320 = sphi 0, %s318
      %s321 = sphi 0, %s320
      %s335 = sphi 0, %s321
      %s341 = sphi 0, %s343
      %s344 = sphi 0, %s341
      %s345 = sphi 0, %s344
      %s361 = sphi 0, %s345
    $region4: #{tpu_custom_call.1} parent=1 // loop_header_branch
      %30 = sbr.rel (%p28) target = $region8
    $region5: #{tpu_custom_call.1} parent=1 // loop_body
      %s32 = ssub.s32 %s27, 1
      %s33 = ssub.s32 %s27, 2
      %s34 = sadd.s32 %s27, 1
      %s35 = ssub.s32 %s27, %s34
      %p36 = scmp.eq.s32.totalorder %s35, 0
      %s38 = sadd.s32 %s37, 1
      %s39 = scalar_select %p36, %s37, %s38
      %p42 = pneg %p36
      %p43 = scmp.eq.s32.totalorder %s27, 1
      %p44 = por %p42, %p43
      %p45 = scmp.ne.s32.totalorder %s37, %s40
      %p46 = scmp.eq.s32.totalorder %s27, 0
      %p47 = por %p45, %p46
      %p48 = scmp.ne.s32.totalorder %s37, %s40
      %p49 = scmp.eq.s32.totalorder %s32, 1
      %p50 = por %p48, %p49
      %p51 = scmp.ne.s32.totalorder %s40, %s41
      %p52 = scmp.eq.s32.totalorder %s32, 0
      %p53 = por %p51, %p52
      %p54 = scmp.ne.s32.totalorder %s40, %s41
      %p55 = scmp.eq.s32.totalorder %s33, 1
      %p56 = por %p54, %p55
      %p58 = scmp.ne.s32.totalorder %s41, %s57
      %p59 = scmp.eq.s32.totalorder %s33, 0
      %p60 = por %p58, %p59
      %s61 = ssub.s32 %s27, %s34
      %p62 = scmp.eq.s32.totalorder %s61, 0
      %s64 = sadd.s32 %s63, 1
      %s65 = scalar_select %p62, %s63, %s64
      %p68 = pneg %p62
      %p69 = scmp.eq.s32.totalorder %s27, 1
      %p70 = por %p68, %p69
      %p71 = scmp.ne.s32.totalorder %s63, %s66
      %p72 = scmp.eq.s32.totalorder %s27, 0
      %p73 = por %p71, %p72
      %p74 = scmp.ne.s32.totalorder %s63, %s66
      %p75 = scmp.eq.s32.totalorder %s32, 1
      %p76 = por %p74, %p75
      %p77 = scmp.ne.s32.totalorder %s66, %s67
      %p78 = scmp.eq.s32.totalorder %s32, 0
      %p79 = por %p77, %p78
      %p80 = scmp.ne.s32.totalorder %s66, %s67
      %p81 = scmp.eq.s32.totalorder %s33, 1
      %p82 = por %p80, %p81
      %p84 = scmp.ne.s32.totalorder %s67, %s83
      %p85 = scmp.eq.s32.totalorder %s33, 0
      %p86 = por %p84, %p85
      %s88 = sadd.s32 %s87, 1
      %p91 = scmp.eq.s32.totalorder %s27, 1
      %p92 = scmp.ne.s32.totalorder %s87, %s89
      %p93 = scmp.eq.s32.totalorder %s27, 0
      %p94 = por %p92, %p93
      %p95 = scmp.ne.s32.totalorder %s87, %s89
      %p96 = scmp.eq.s32.totalorder %s32, 1
      %p97 = por %p95, %p96
      %p98 = scmp.ne.s32.totalorder %s89, %s90
      %p99 = scmp.eq.s32.totalorder %s32, 0
      %p100 = por %p98, %p99
      %p101 = scmp.ne.s32.totalorder %s89, %s90
      %p102 = scmp.eq.s32.totalorder %s33, 1
      %p103 = por %p101, %p102
      %p105 = scmp.ne.s32.totalorder %s90, %s104
      %p106 = scmp.eq.s32.totalorder %s33, 0
      %p107 = por %p105, %p106
      %s109 = sadd.s32 %s108, 1
      %p112 = scmp.eq.s32.totalorder %s27, 1
      %p113 = scmp.ne.s32.totalorder %s108, %s110
      %p114 = scmp.eq.s32.totalorder %s27, 0
      %p115 = por %p113, %p114
      %p116 = scmp.ne.s32.totalorder %s108, %s110
      %p117 = scmp.eq.s32.totalorder %s32, 1
      %p118 = por %p116, %p117
      %p119 = scmp.ne.s32.totalorder %s110, %s111
      %p120 = scmp.eq.s32.totalorder %s32, 0
      %p121 = por %p119, %p120
      %p122 = scmp.ne.s32.totalorder %s110, %s111
      %p123 = scmp.eq.s32.totalorder %s33, 1
      %p124 = por %p122, %p123
      %p126 = scmp.ne.s32.totalorder %s111, %s125
      %p127 = scmp.eq.s32.totalorder %s33, 0
      %p128 = por %p126, %p127
      %s130 = sadd.s32 %s129, 1
      %p133 = scmp.eq.s32.totalorder %s27, 1
      %p134 = scmp.ne.s32.totalorder %s129, %s131
      %p135 = scmp.eq.s32.totalorder %s27, 0
      %p136 = por %p134, %p135
      %p137 = scmp.ne.s32.totalorder %s129, %s131
      %p138 = scmp.eq.s32.totalorder %s32, 1
      %p139 = por %p137, %p138
      %p140 = scmp.ne.s32.totalorder %s131, %s132
      %p141 = scmp.eq.s32.totalorder %s32, 0
      %p142 = por %p140, %p141
      %p143 = scmp.ne.s32.totalorder %s131, %s132
      %p144 = scmp.eq.s32.totalorder %s33, 1
      %p145 = por %p143, %p144
      %p147 = scmp.ne.s32.totalorder %s132, %s146
      %p148 = scmp.eq.s32.totalorder %s33, 0
      %p149 = por %p147, %p148
      %s151 = sadd.s32 %s150, 1
      %p154 = scmp.eq.s32.totalorder %s27, 1
      %p155 = scmp.ne.s32.totalorder %s150, %s152
      %p156 = scmp.eq.s32.totalorder %s27, 0
      %p157 = por %p155, %p156
      %p158 = scmp.ne.s32.totalorder %s150, %s152
      %p159 = scmp.eq.s32.totalorder %s32, 1
      %p160 = por %p158, %p159
      %p161 = scmp.ne.s32.totalorder %s152, %s153
      %p162 = scmp.eq.s32.totalorder %s32, 0
      %p163 = por %p161, %p162
      %p164 = scmp.ne.s32.totalorder %s152, %s153
      %p165 = scmp.eq.s32.totalorder %s33, 1
      %p166 = por %p164, %p165
      %p168 = scmp.ne.s32.totalorder %s153, %s167
      %p169 = scmp.eq.s32.totalorder %s33, 0
      %p170 = por %p168, %p169
      %s172 = sadd.s32 %s171, 1
      %p175 = scmp.eq.s32.totalorder %s27, 1
      %p176 = scmp.ne.s32.totalorder %s171, %s173
      %p177 = scmp.eq.s32.totalorder %s27, 0
      %p178 = por %p176, %p177
      %p179 = scmp.ne.s32.totalorder %s171, %s173
      %p180 = scmp.eq.s32.totalorder %s32, 1
      %p181 = por %p179, %p180
      %p182 = scmp.ne.s32.totalorder %s173, %s174
      %p183 = scmp.eq.s32.totalorder %s32, 0
      %p184 = por %p182, %p183
      %p185 = scmp.ne.s32.totalorder %s173, %s174
      %p186 = scmp.eq.s32.totalorder %s33, 1
      %p187 = por %p185, %p186
      %p189 = scmp.ne.s32.totalorder %s174, %s188
      %p190 = scmp.eq.s32.totalorder %s33, 0
      %p191 = por %p189, %p190
      %s193 = sadd.s32 %s192, 1
      %p196 = scmp.eq.s32.totalorder %s27, 1
      %p197 = scmp.ne.s32.totalorder %s192, %s194
      %p198 = scmp.eq.s32.totalorder %s27, 0
      %p199 = por %p197, %p198
      %p200 = scmp.ne.s32.totalorder %s192, %s194
      %p201 = scmp.eq.s32.totalorder %s32, 1
      %p202 = por %p200, %p201
      %p203 = scmp.ne.s32.totalorder %s194, %s195
      %p204 = scmp.eq.s32.totalorder %s32, 0
      %p205 = por %p203, %p204
      %p206 = scmp.ne.s32.totalorder %s194, %s195
      %p207 = scmp.eq.s32.totalorder %s33, 1
      %p208 = por %p206, %p207
      %p210 = scmp.ne.s32.totalorder %s195, %s209
      %p211 = scmp.eq.s32.totalorder %s33, 0
      %p212 = por %p210, %p211
      %s214 = sadd.s32 %s213, 1
      %p217 = scmp.eq.s32.totalorder %s27, 1
      %p218 = scmp.ne.s32.totalorder %s213, %s215
      %p219 = scmp.eq.s32.totalorder %s27, 0
      %p220 = por %p218, %p219
      %p221 = scmp.ne.s32.totalorder %s213, %s215
      %p222 = scmp.eq.s32.totalorder %s32, 1
      %p223 = por %p221, %p222
      %p224 = scmp.ne.s32.totalorder %s215, %s216
      %p225 = scmp.eq.s32.totalorder %s32, 0
      %p226 = por %p224, %p225
      %p227 = scmp.ne.s32.totalorder %s215, %s216
      %p228 = scmp.eq.s32.totalorder %s33, 1
      %p229 = por %p227, %p228
      %p231 = scmp.ne.s32.totalorder %s216, %s230
      %p232 = scmp.eq.s32.totalorder %s33, 0
      %p233 = por %p231, %p232
      %s235 = sadd.s32 %s234, 1
      %p238 = scmp.eq.s32.totalorder %s27, 1
      %p239 = scmp.ne.s32.totalorder %s234, %s236
      %p240 = scmp.eq.s32.totalorder %s27, 0
      %p241 = por %p239, %p240
      %p242 = scmp.ne.s32.totalorder %s234, %s236
      %p243 = scmp.eq.s32.totalorder %s32, 1
      %p244 = por %p242, %p243
      %p245 = scmp.ne.s32.totalorder %s236, %s237
      %p246 = scmp.eq.s32.totalorder %s32, 0
      %p247 = por %p245, %p246
      %p248 = scmp.ne.s32.totalorder %s236, %s237
      %p249 = scmp.eq.s32.totalorder %s33, 1
      %p250 = por %p248, %p249
      %p252 = scmp.ne.s32.totalorder %s237, %s251
      %p253 = scmp.eq.s32.totalorder %s33, 0
      %p254 = por %p252, %p253
      %s256 = sadd.s32 %s255, 1
      %p259 = scmp.eq.s32.totalorder %s27, 1
      %p260 = scmp.ne.s32.totalorder %s255, %s257
      %p261 = scmp.eq.s32.totalorder %s27, 0
      %p262 = por %p260, %p261
      %p263 = scmp.ne.s32.totalorder %s255, %s257
      %p264 = scmp.eq.s32.totalorder %s32, 1
      %p265 = por %p263, %p264
      %p266 = scmp.ne.s32.totalorder %s257, %s258
      %p267 = scmp.eq.s32.totalorder %s32, 0
      %p268 = por %p266, %p267
      %p269 = scmp.ne.s32.totalorder %s257, %s258
      %p270 = scmp.eq.s32.totalorder %s33, 1
      %p271 = por %p269, %p270
      %p273 = scmp.ne.s32.totalorder %s258, %s272
      %p274 = scmp.eq.s32.totalorder %s33, 0
      %p275 = por %p273, %p274
      %s277 = sadd.s32 %s276, 1
      %p280 = scmp.eq.s32.totalorder %s27, 1
      %p281 = scmp.ne.s32.totalorder %s276, %s278
      %p282 = scmp.eq.s32.totalorder %s27, 0
      %p283 = por %p281, %p282
      %p284 = scmp.ne.s32.totalorder %s276, %s278
      %p285 = scmp.eq.s32.totalorder %s32, 1
      %p286 = por %p284, %p285
      %p287 = scmp.ne.s32.totalorder %s278, %s279
      %p288 = scmp.eq.s32.totalorder %s32, 0
      %p289 = por %p287, %p288
      %p290 = scmp.ne.s32.totalorder %s278, %s279
      %p291 = scmp.eq.s32.totalorder %s33, 1
      %p292 = por %p290, %p291
      %p294 = scmp.ne.s32.totalorder %s279, %s293
      %p295 = scmp.eq.s32.totalorder %s33, 0
      %p296 = por %p294, %p295
      %s298 = sadd.s32 %s297, 1
      %p301 = scmp.eq.s32.totalorder %s27, 1
      %p302 = scmp.ne.s32.totalorder %s297, %s299
      %p303 = scmp.eq.s32.totalorder %s27, 0
      %p304 = por %p302, %p303
      %p305 = scmp.ne.s32.totalorder %s297, %s299
      %p306 = scmp.eq.s32.totalorder %s32, 1
      %p307 = por %p305, %p306
      %p308 = scmp.ne.s32.totalorder %s299, %s300
      %p309 = scmp.eq.s32.totalorder %s32, 0
      %p310 = por %p308, %p309
      %p311 = scmp.ne.s32.totalorder %s299, %s300
      %p312 = scmp.eq.s32.totalorder %s33, 1
      %p313 = por %p311, %p312
      %p315 = scmp.ne.s32.totalorder %s300, %s314
      %p316 = scmp.eq.s32.totalorder %s33, 0
      %p317 = por %p315, %p316
      %s319 = sadd.s32 %s318, 1
      %p322 = scmp.eq.s32.totalorder %s27, 1
      %p323 = scmp.ne.s32.totalorder %s318, %s320
      %p324 = scmp.eq.s32.totalorder %s27, 0
      %p325 = por %p323, %p324
      %p326 = scmp.ne.s32.totalorder %s318, %s320
      %p327 = scmp.eq.s32.totalorder %s32, 1
      %p328 = por %p326, %p327
      %p329 = scmp.ne.s32.totalorder %s320, %s321
      %p330 = scmp.eq.s32.totalorder %s32, 0
      %p331 = por %p329, %p330
      %p332 = scmp.ne.s32.totalorder %s320, %s321
      %p333 = scmp.eq.s32.totalorder %s33, 1
      %p334 = por %p332, %p333
      %p336 = scmp.ne.s32.totalorder %s321, %s335
      %p337 = scmp.eq.s32.totalorder %s33, 0
      %p338 = por %p336, %p337
      %s339 = ssub.s32 %s27, %s34
      %p340 = scmp.eq.s32.totalorder %s339, 0
      %s342 = sadd.s32 %s341, 1
      %s343 = scalar_select %p340, %s341, %s342
      %p346 = pneg %p340
      %p347 = scmp.eq.s32.totalorder %s27, 1
      %p348 = por %p346, %p347
      %p349 = scmp.ne.s32.totalorder %s341, %s344
      %p350 = scmp.eq.s32.totalorder %s27, 0
      %p351 = por %p349, %p350
      %p352 = scmp.ne.s32.totalorder %s341, %s344
      %p353 = scmp.eq.s32.totalorder %s32, 1
      %p354 = por %p352, %p353
      %p355 = scmp.ne.s32.totalorder %s344, %s345
      %p356 = scmp.eq.s32.totalorder %s32, 0
      %p357 = por %p355, %p356
      %p358 = scmp.ne.s32.totalorder %s344, %s345
      %p359 = scmp.eq.s32.totalorder %s33, 1
      %p360 = por %p358, %p359
      %p362 = scmp.ne.s32.totalorder %s345, %s361
      %p363 = scmp.eq.s32.totalorder %s33, 0
      %p364 = por %p362, %p363
      %p365 = scmp.le.s32.totalorder 1, %s27
      %p366 = scmp.lt.s32.totalorder %s27, 3
      %p367 = pnand %p365, %p366
      %p368 = pneg %p367
      // Predicated region
      $region9: #{tpu_custom_call.1} parent=5 // pred_check
        _
      $region10: #{tpu_custom_call.1} parent=5 // pred_check_branch
        %370 = sbr.rel (%p367) target = $region12
      $region11: #{tpu_custom_call.1} parent=5 // pred_region
        %s371 = ssub.s32 %s27, 1
        // Predicated region
        $region13: #{tpu_custom_call.1} parent=11 // pred_check
          %p372 = pneg %p100
        $region14: #{tpu_custom_call.1} parent=11 // pred_check_branch
          %374 = sbr.rel (%p372) target = $region16
        $region15: #{tpu_custom_call.1} parent=11 // pred_region
          _
        $region16: #{tpu_custom_call.1} parent=11 // pred_fallthru
          _
        // Predicated region
        $region17: #{tpu_custom_call.1} parent=11 // pred_check
          %p375 = pneg %p121
        $region18: #{tpu_custom_call.1} parent=11 // pred_check_branch
          %377 = sbr.rel (%p375) target = $region20
        $region19: #{tpu_custom_call.1} parent=11 // pred_region
          _
        $region20: #{tpu_custom_call.1} parent=11 // pred_fallthru
          _
        // Predicated region
        $region21: #{tpu_custom_call.1} parent=11 // pred_check
          %p378 = pneg %p142
        $region22: #{tpu_custom_call.1} parent=11 // pred_check_branch
          %380 = sbr.rel (%p378) target = $region24
        $region23: #{tpu_custom_call.1} parent=11 // pred_region
          _
        $region24: #{tpu_custom_call.1} parent=11 // pred_fallthru
          _
        // Predicated region
        $region25: #{tpu_custom_call.1} parent=11 // pred_check
          %p381 = pneg %p163
        $region26: #{tpu_custom_call.1} parent=11 // pred_check_branch
          %383 = sbr.rel (%p381) target = $region28
        $region27: #{tpu_custom_call.1} parent=11 // pred_region
          _
        $region28: #{tpu_custom_call.1} parent=11 // pred_fallthru
          _
        // Predicated region
        $region29: #{tpu_custom_call.1} parent=11 // pred_check
          %p384 = pneg %p184
        $region30: #{tpu_custom_call.1} parent=11 // pred_check_branch
          %386 = sbr.rel (%p384) target = $region32
        $region31: #{tpu_custom_call.1} parent=11 // pred_region
          _
        $region32: #{tpu_custom_call.1} parent=11 // pred_fallthru
          _
        // Predicated region
        $region33: #{tpu_custom_call.1} parent=11 // pred_check
          %p387 = pneg %p205
        $region34: #{tpu_custom_call.1} parent=11 // pred_check_branch
          %389 = sbr.rel (%p387) target = $region36
        $region35: #{tpu_custom_call.1} parent=11 // pred_region
          %s391 = ssub.s32 16, 16
          %392 = vsyncadd [#allocation6], %s391
          %s394 = sshll.u32 [#allocation5], 4
          %s395 = int_to_ptr.vmem [resolvable:$true] %s394
          %397 = dma.hbm_to_vmem [thread:$0]  %s7, 16, %s395, [#allocation6]
        $region36: #{tpu_custom_call.1} parent=11 // pred_fallthru
          _
        // Predicated region
        $region37: #{tpu_custom_call.1} parent=11 // pred_check
          %p398 = pneg %p226
        $region38: #{tpu_custom_call.1} parent=11 // pred_check_branch
          %400 = sbr.rel (%p398) target = $region40
        $region39: #{tpu_custom_call.1} parent=11 // pred_region
          _
        $region40: #{tpu_custom_call.1} parent=11 // pred_fallthru
          _
        // Predicated region
        $region41: #{tpu_custom_call.1} parent=11 // pred_check
          %p401 = pneg %p247
        $region42: #{tpu_custom_call.1} parent=11 // pred_check_branch
          %403 = sbr.rel (%p401) target = $region44
        $region43: #{tpu_custom_call.1} parent=11 // pred_region
          %s405 = ssub.s32 16, 16
          %406 = vsyncadd [#allocation6], %s405
          %s408 = sshll.u32 [#allocation7], 4
          %s409 = int_to_ptr.vmem [resolvable:$true] %s408
          %411 = dma.hbm_to_vmem [thread:$0]  %s9, 16, %s409, [#allocation6]
        $region44: #{tpu_custom_call.1} parent=11 // pred_fallthru
          _
        // Predicated region
        $region45: #{tpu_custom_call.1} parent=11 // pred_check
          %p412 = pneg %p268
        $region46: #{tpu_custom_call.1} parent=11 // pred_check_branch
          %414 = sbr.rel (%p412) target = $region48
        $region47: #{tpu_custom_call.1} parent=11 // pred_region
          _
        $region48: #{tpu_custom_call.1} parent=11 // pred_fallthru
          _
        // Predicated region
        $region49: #{tpu_custom_call.1} parent=11 // pred_check
          %p415 = pneg %p289
        $region50: #{tpu_custom_call.1} parent=11 // pred_check_branch
          %417 = sbr.rel (%p415) target = $region52
        $region51: #{tpu_custom_call.1} parent=11 // pred_region
          _
        $region52: #{tpu_custom_call.1} parent=11 // pred_fallthru
          _
        // Predicated region
        $region53: #{tpu_custom_call.1} parent=11 // pred_check
          %p418 = pneg %p310
        $region54: #{tpu_custom_call.1} parent=11 // pred_check_branch
          %420 = sbr.rel (%p418) target = $region56
        $region55: #{tpu_custom_call.1} parent=11 // pred_region
          _
        $region56: #{tpu_custom_call.1} parent=11 // pred_fallthru
          _
        // Predicated region
        $region57: #{tpu_custom_call.1} parent=11 // pred_check
          %p421 = pneg %p331
        $region58: #{tpu_custom_call.1} parent=11 // pred_check_branch
          %423 = sbr.rel (%p421) target = $region60
        $region59: #{tpu_custom_call.1} parent=11 // pred_region
          _
        $region60: #{tpu_custom_call.1} parent=11 // pred_fallthru
          _
      $region12: #{tpu_custom_call.1} parent=5 // pred_fallthru
        _
      %p424 = scmp.lt.s32.totalorder %s27, 2
      // Predicated region
      $region61: #{tpu_custom_call.1} parent=5 // pred_check
        %p425 = pneg %p424
      $region62: #{tpu_custom_call.1} parent=5 // pred_check_branch
        %427 = sbr.rel (%p425) target = $region64
      $region63: #{tpu_custom_call.1} parent=5 // pred_region
        // Predicated region
        $region65: #{tpu_custom_call.1} parent=63 // pred_check
          %p428 = pneg %p47
        $region66: #{tpu_custom_call.1} parent=63 // pred_check_branch
          %430 = sbr.rel (%p428) target = $region68
        $region67: #{tpu_custom_call.1} parent=63 // pred_region
          %s431 = sand.u32 %s37, 1
          %s432 = scalar_lea.sflag [#allocation3], %s431
          %s433 = sand.u32 %s37, 1
          %s434 = smul.addr %s433, 8
          %s435 = scalar_lea.vmem [#allocation2], %s434
          %s437 = ssub.s32 128, 128
          %438 = vsyncadd %s432, %s437
          %s439 = smul.addr %s27, 128
          %s440 = scalar_lea.hbm %s0, %s439
          %s442 = sshll.u32 %s435, 4
          %s443 = int_to_ptr.vmem [resolvable:$true] %s442
          %445 = dma.hbm_to_vmem [thread:$0]  %s440, 128, %s443, %s432
        $region68: #{tpu_custom_call.1} parent=63 // pred_fallthru
          _
        // Predicated region
        $region69: #{tpu_custom_call.1} parent=63 // pred_check
          %p446 = pneg %p73
        $region70: #{tpu_custom_call.1} parent=63 // pred_check_branch
          %448 = sbr.rel (%p446) target = $region72
        $region71: #{tpu_custom_call.1} parent=63 // pred_region
          %p449 = scmp.lt.s32.totalorder %s27, 1
          %s450 = scalar_select %p449, %s27, 1
          %s451 = scalar_lea.vmem %s1, %s450
        $region72: #{tpu_custom_call.1} parent=63 // pred_fallthru
          _
      $region64: #{tpu_custom_call.1} parent=5 // pred_fallthru
        _
      %p452 = scmp.le.s32.totalorder 1, %s27
      %p453 = scmp.lt.s32.totalorder %s27, 3
      %p454 = pnand %p452, %p453
      %p455 = pneg %p454
      // Predicated region
      $region73: #{tpu_custom_call.1} parent=5 // pred_check
        _
      $region74: #{tpu_custom_call.1} parent=5 // pred_check_branch
        %457 = sbr.rel (%p454) target = $region76
      $region75: #{tpu_custom_call.1} parent=5 // pred_region
        %s458 = ssub.s32 %s27, 1
        %s459 = sand.u32 %s40, 1
        %s460 = scalar_lea.sflag [#allocation3], %s459
        %s461 = sand.u32 %s40, 1
        %s462 = smul.addr %s461, 8
        %s463 = scalar_lea.vmem [#allocation2], %s462
        // Predicated region
        $region77: #{tpu_custom_call.1} parent=75 // pred_check
          %p464 = pneg %p53
        $region78: #{tpu_custom_call.1} parent=75 // pred_check_branch
          %466 = sbr.rel (%p464) target = $region80
        $region79: #{tpu_custom_call.1} parent=75 // pred_region
          %467 = dma.done %s460, 128
        $region80: #{tpu_custom_call.1} parent=75 // pred_fallthru
          _
        // Predicated region
        $region81: #{tpu_custom_call.1} parent=75 // pred_check
          %p468 = pneg %p205
        $region82: #{tpu_custom_call.1} parent=75 // pred_check_branch
          %470 = sbr.rel (%p468) target = $region84
        $region83: #{tpu_custom_call.1} parent=75 // pred_region
          %471 = dma.done [#allocation6], 16
        $region84: #{tpu_custom_call.1} parent=75 // pred_fallthru
          _
        // Predicated region
        $region85: #{tpu_custom_call.1} parent=75 // pred_check
          %p472 = pneg %p247
        $region86: #{tpu_custom_call.1} parent=75 // pred_check_branch
          %474 = sbr.rel (%p472) target = $region88
        $region87: #{tpu_custom_call.1} parent=75 // pred_region
          %475 = dma.done [#allocation6], 16
        $region88: #{tpu_custom_call.1} parent=75 // pred_fallthru
          _
        %s476 = sand.u32 %s40, 1
        %s477 = scalar_lea.sflag [#allocation3], %s476
        %s478 = sand.u32 %s40, 1
        %s479 = smul.addr %s478, 8
        %s480 = scalar_lea.vmem [#allocation2], %s479
        %p481 = pneg %p53
        %p482 = pneg %p50
        %p483 = scmp.lt.s32.totalorder %s32, 1
        %s484 = scalar_select %p483, %s32, 1
        %s485 = scalar_lea.vmem %s1, %s484
        %p486 = pneg %p79
        %p487 = pneg %p76
        %p488 = pneg %p100
        %p489 = pneg %p97
        %p490 = pneg %p121
        %p491 = pneg %p118
        %p492 = pneg %p142
        %p493 = pneg %p139
        %p494 = pneg %p163
        %p495 = pneg %p160
        %p496 = pneg %p184
        %p497 = pneg %p181
        %p498 = pneg %p205
        %p499 = pneg %p202
        %p500 = pneg %p226
        %p501 = pneg %p223
        %p502 = pneg %p247
        %p503 = pneg %p244
        %p504 = pneg %p268
        %p505 = pneg %p265
        %p506 = pneg %p289
        %p507 = pneg %p286
        %p508 = pneg %p310
        %p509 = pneg %p307
        %p510 = pneg %p331
        %p511 = pneg %p328
        %p512 = pneg %p357
        %p513 = pneg %p354
        %s514 = sand.u32 %s344, 1
        %s515 = scalar_lea.sflag [#allocation4], %s514
        %s516 = sand.u32 %s344, 1
        %s517 = smul.addr %s516, 8
        %s518 = scalar_lea.vmem [#allocation8], %s517
        %p519 = scmp.lt.s32.totalorder %s32, 1
        %s520 = scalar_select %p519, %s32, 1
        %s521 = scalar_lea.vmem %s1, %s520
        %v522 = vld [vmem:[%s463] sm:$0xff]
        %v523 = vld [vmem:[%s521] sm:$0x1]
        %v524 = vsub.f32 %v523, 1.0
        %v525 = vmul.f32 %v524, 1e+09
        %v526 = vld [vmem:[%s2] sm:$0xff]
        %v527 = vld [vmem:[%s2 + $0x8] sm:$0xff]
        %v528 = vld [vmem:[%s2 + $0x10] sm:$0xff]
        %v529 = vld [vmem:[%s2 + $0x18] sm:$0xff]
        %v530 = vld [vmem:[%s3] sm:$0x1]
        %v532 = vlaneseq
        %v533 = vshrl.u32 %v532, 7
        %v534 = vsub.s32 0, %v533
        %v535 = vrot.slane %v530, %v534
        %vm537 = vcmask 261120
        %v539 = vsel %vm537, %v522, 0
        %541 = vmatprep.subr.mxu0 0.0
        %542 = vmatpush1.msra.mxu0 %v526
        %543 = vmatprep.subr.mxu0 0.0
        %544 = vmatpush1.msra.mxu0 %v527
        %545 = vmatprep.subr.mxu0 0.0
        %546 = vmatpush1.msra.mxu0 %v528
        %547 = vmatprep.subr.mxu0 0.0
        %548 = vmatpush1.msra.mxu0 %v529
        %549 = vmatprep.subr.mxu0 0.0
        %550 = vmatpush1.msra.mxu0 0.0
        %551 = vmatprep.subr.mxu0 0.0
        %552 = vmatpush1.msra.mxu0 0.0
        %553 = vmatprep.subr.mxu0 0.0
        %554 = vmatpush1.msra.mxu0 0.0
        %555 = vmatprep.subr.mxu0 0.0
        %556 = vmatpush1.msra.mxu0 0.0
        %557 = vmatprep.subr.mxu0 0.0
        %558 = vmatpush1.msra.mxu0 0.0
        %559 = vmatprep.subr.mxu0 0.0
        %560 = vmatpush1.msra.mxu0 0.0
        %561 = vmatprep.subr.mxu0 0.0
        %562 = vmatpush1.msra.mxu0 0.0
        %563 = vmatprep.subr.mxu0 0.0
        %564 = vmatpush1.msra.mxu0 0.0
        %565 = vmatprep.subr.mxu0 0.0
        %566 = vmatpush1.msra.mxu0 0.0
        %567 = vmatprep.subr.mxu0 0.0
        %568 = vmatpush1.msra.mxu0 0.0
        %569 = vmatprep.subr.mxu0 0.0
        %570 = vmatpush1.msra.mxu0 0.0
        %571 = vmatprep.subr.mxu0 0.0
        %572 = vmatpush1.msra.mxu0 0.0
        %573 = vmatprep.subr.mxu0 0.0
        %574 = vmatpush1.msra.mxu0 0.0
        %575 = vmatprep.subr.mxu0 0.0
        %576 = vmatpush1.msra.mxu0 0.0
        %577 = vmatprep.subr.mxu0 0.0
        %578 = vmatpush1.msra.mxu0 0.0
        %579 = vmatprep.subr.mxu0 0.0
        %580 = vmatpush1.msra.mxu0 0.0
        %581 = vmatprep.subr.mxu0 0.0
        %582 = vmatpush1.msra.mxu0 0.0
        %583 = vmatprep.subr.mxu0 0.0
        %584 = vmatpush1.msra.mxu0 0.0
        %585 = vmatprep.subr.mxu0 0.0
        %586 = vmatpush1.msra.mxu0 0.0
        %587 = vmatprep.subr.mxu0 0.0
        %588 = vmatpush1.msra.mxu0 0.0
        %589 = vmatprep.subr.mxu0 0.0
        %590 = vmatpush1.msra.mxu0 0.0
        %591 = vmatprep.subr.mxu0 0.0
        %592 = vmatpush1.msra.mxu0 0.0
        %593 = vmatprep.subr.mxu0 0.0
        %594 = vmatpush1.msra.mxu0 0.0
        %595 = vmatprep.subr.mxu0 0.0
        %596 = vmatpush1.msra.mxu0 0.0
        %597 = vmatprep.subr.mxu0 0.0
        %598 = vmatpush1.msra.mxu0 0.0
        %599 = vmatprep.subr.mxu0 0.0
        %600 = vmatpush1.msra.mxu0 0.0
        %601 = vmatprep.subr.mxu0 0.0
        %602 = vmatpush1.msra.mxu0 0.0
        %603 = vmatprep.subr.mxu0 0.0
        %604 = vmatpush1.msra.mxu0 0.0
        %605 = vmatprep.mubr.f32.mxu0 0.0
        %606 = vmatmul.mubr.f32.gmra.mrb[0].mxu0 %v539
        %v607 = vpop.f32.mrb[0].mxu0
        %v608 = vadd.f32 %v535, %v607
        %v609 = vpop.f32.mrb[0].mxu0
        %610 = vdwg.mxu0
        %v611 = vld [vmem:[%s4] sm:$0xff]
        %v612 = vld [vmem:[%s4 + $0x8] sm:$0xff]
        %v613 = vld [vmem:[%s4 + $0x10] sm:$0xff]
        %v614 = vld [vmem:[%s4 + $0x18] sm:$0xff]
        %616 = vrot.lane.b32.xlu0 %v608, 96
        %v617 = vpop.permute.xlu0 %616
        %vm618 = vcmask 64512
        %v619 = vsel %vm618, %v608, 0
        %v621 = vsel %vm618, %v617, 0
        %623 = vmatprep.subr.mxu0 0.0
        %624 = vmatpush1.xpose.msra.mxu0 %v621
        %625 = vmatprep.subr.mxu0 0.0
        %626 = vmatpush1.xpose.msra.mxu0 0.0
        %627 = vmatprep.subr.mxu0 0.0
        %628 = vmatpush1.xpose.msra.mxu0 0.0
        %629 = vmatprep.subr.mxu0 0.0
        %630 = vmatpush1.xpose.msra.mxu0 0.0
        %631 = vmatprep.subr.mxu0 0.0
        %632 = vmatpush1.xpose.msra.mxu0 0.0
        %633 = vmatprep.subr.mxu0 0.0
        %634 = vmatpush1.xpose.msra.mxu0 0.0
        %635 = vmatprep.subr.mxu0 0.0
        %636 = vmatpush1.xpose.msra.mxu0 0.0
        %637 = vmatprep.subr.mxu0 0.0
        %638 = vmatpush1.xpose.msra.mxu0 0.0
        %639 = vmatprep.subr.mxu0 0.0
        %640 = vmatpush1.xpose.msra.mxu0 0.0
        %641 = vmatprep.subr.mxu0 0.0
        %642 = vmatpush1.xpose.msra.mxu0 0.0
        %643 = vmatprep.subr.mxu0 0.0
        %644 = vmatpush1.xpose.msra.mxu0 0.0
        %645 = vmatprep.subr.mxu0 0.0
        %646 = vmatpush1.xpose.msra.mxu0 0.0
        %647 = vmatprep.subr.mxu0 0.0
        %648 = vmatpush1.xpose.msra.mxu0 0.0
        %649 = vmatprep.subr.mxu0 0.0
        %650 = vmatpush1.xpose.msra.mxu0 0.0
        %651 = vmatprep.subr.mxu0 0.0
        %652 = vmatpush1.xpose.msra.mxu0 0.0
        %653 = vmatprep.subr.mxu0 0.0
        %654 = vmatpush1.xpose.msra.mxu0 0.0
        %655 = vmatprep.subr.mxu0 0.0
        %656 = vmatpush1.xpose.msra.mxu0 0.0
        %657 = vmatprep.subr.mxu0 0.0
        %658 = vmatpush1.xpose.msra.mxu0 0.0
        %659 = vmatprep.subr.mxu0 0.0
        %660 = vmatpush1.xpose.msra.mxu0 0.0
        %661 = vmatprep.subr.mxu0 0.0
        %662 = vmatpush1.xpose.msra.mxu0 0.0
        %663 = vmatprep.subr.mxu0 0.0
        %664 = vmatpush1.xpose.msra.mxu0 0.0
        %665 = vmatprep.subr.mxu0 0.0
        %666 = vmatpush1.xpose.msra.mxu0 0.0
        %667 = vmatprep.subr.mxu0 0.0
        %668 = vmatpush1.xpose.msra.mxu0 0.0
        %669 = vmatprep.subr.mxu0 0.0
        %670 = vmatpush1.xpose.msra.mxu0 0.0
        %671 = vmatprep.subr.mxu0 0.0
        %672 = vmatpush1.xpose.msra.mxu0 0.0
        %673 = vmatprep.subr.mxu0 0.0
        %674 = vmatpush1.xpose.msra.mxu0 0.0
        %675 = vmatprep.subr.mxu0 0.0
        %676 = vmatpush1.xpose.msra.mxu0 0.0
        %677 = vmatprep.subr.mxu0 0.0
        %678 = vmatpush1.xpose.msra.mxu0 0.0
        %679 = vmatprep.subr.mxu0 0.0
        %680 = vmatpush1.xpose.msra.mxu0 0.0
        %681 = vmatprep.subr.mxu0 0.0
        %682 = vmatpush1.xpose.msra.mxu0 0.0
        %683 = vmatprep.subr.mxu0 0.0
        %684 = vmatpush1.xpose.msra.mxu0 0.0
        %685 = vmatprep.subr.mxu0 0.0
        %686 = vmatpush1.xpose.msra.mxu0 0.0
        %687 = vmatprep.mubr.f32.mxu0 0.0
        %688 = vmatmul.mubr.f32.gmra.mrb[0].mxu0 %v619
        %v689 = vpop.f32.mrb[0].mxu0
        %v690 = vadd.f32 0.0, %v689
        %v691 = vpop.f32.mrb[0].mxu0
        %692 = vdwg.mxu0
        %v693 = vmul.f32 %v690, 0.35355338
        %v695 = vlaneseq
        %v696 = vshrl.u32 %v695, 7
        %v697 = vsub.s32 0, %v696
        %v698 = vrot.slane %v525, %v697
        %v700 = vadd.f32 %v693, %v698
        %v701 = vsel %vm618, %v700, -inf
        %702 = vmax.xlane.f32.xlu0 %v701
        %v703 = vpop.xlane.xlu0 %702
        %v704 = vsub.f32 %v700, %v703
        %v705 = vmul.f32 %v704, 1.442695
        %v706 = vpow.pop %v705
        %v707 = vsel %vm618, %v706, 0.0
        %708 = vadd.xlane.f32.xlu0 %v707
        %v709 = vpop.xlane.xlu0 %708
        %v710 = vrcp.pop %v709
        %v711 = vmul.f32 %v706, %v710
        %712 = vrot.lane.b32.xlu0 %v608, 64
        %v713 = vpop.permute.xlu0 %712
        %v716 = vsel %vm618, %v711, 0
        %718 = vmatprep.subr.mxu0 0.0
        %719 = vmatpush1.msra.mxu0 %v713
        %720 = vmatprep.subr.mxu0 0.0
        %721 = vmatpush1.msra.mxu0 0.0
        %722 = vmatprep.subr.mxu0 0.0
        %723 = vmatpush1.msra.mxu0 0.0
        %724 = vmatprep.subr.mxu0 0.0
        %725 = vmatpush1.msra.mxu0 0.0
        %726 = vmatprep.subr.mxu0 0.0
        %727 = vmatpush1.msra.mxu0 0.0
        %728 = vmatprep.subr.mxu0 0.0
        %729 = vmatpush1.msra.mxu0 0.0
        %730 = vmatprep.subr.mxu0 0.0
        %731 = vmatpush1.msra.mxu0 0.0
        %732 = vmatprep.subr.mxu0 0.0
        %733 = vmatpush1.msra.mxu0 0.0
        %734 = vmatprep.subr.mxu0 0.0
        %735 = vmatpush1.msra.mxu0 0.0
        %736 = vmatprep.subr.mxu0 0.0
        %737 = vmatpush1.msra.mxu0 0.0
        %738 = vmatprep.subr.mxu0 0.0
        %739 = vmatpush1.msra.mxu0 0.0
        %740 = vmatprep.subr.mxu0 0.0
        %741 = vmatpush1.msra.mxu0 0.0
        %742 = vmatprep.subr.mxu0 0.0
        %743 = vmatpush1.msra.mxu0 0.0
        %744 = vmatprep.subr.mxu0 0.0
        %745 = vmatpush1.msra.mxu0 0.0
        %746 = vmatprep.subr.mxu0 0.0
        %747 = vmatpush1.msra.mxu0 0.0
        %748 = vmatprep.subr.mxu0 0.0
        %749 = vmatpush1.msra.mxu0 0.0
        %750 = vmatprep.subr.mxu0 0.0
        %751 = vmatpush1.msra.mxu0 0.0
        %752 = vmatprep.subr.mxu0 0.0
        %753 = vmatpush1.msra.mxu0 0.0
        %754 = vmatprep.subr.mxu0 0.0
        %755 = vmatpush1.msra.mxu0 0.0
        %756 = vmatprep.subr.mxu0 0.0
        %757 = vmatpush1.msra.mxu0 0.0
        %758 = vmatprep.subr.mxu0 0.0
        %759 = vmatpush1.msra.mxu0 0.0
        %760 = vmatprep.subr.mxu0 0.0
        %761 = vmatpush1.msra.mxu0 0.0
        %762 = vmatprep.subr.mxu0 0.0
        %763 = vmatpush1.msra.mxu0 0.0
        %764 = vmatprep.subr.mxu0 0.0
        %765 = vmatpush1.msra.mxu0 0.0
        %766 = vmatprep.subr.mxu0 0.0
        %767 = vmatpush1.msra.mxu0 0.0
        %768 = vmatprep.subr.mxu0 0.0
        %769 = vmatpush1.msra.mxu0 0.0
        %770 = vmatprep.subr.mxu0 0.0
        %771 = vmatpush1.msra.mxu0 0.0
        %772 = vmatprep.subr.mxu0 0.0
        %773 = vmatpush1.msra.mxu0 0.0
        %774 = vmatprep.subr.mxu0 0.0
        %775 = vmatpush1.msra.mxu0 0.0
        %776 = vmatprep.subr.mxu0 0.0
        %777 = vmatpush1.msra.mxu0 0.0
        %778 = vmatprep.subr.mxu0 0.0
        %779 = vmatpush1.msra.mxu0 0.0
        %780 = vmatprep.subr.mxu0 0.0
        %781 = vmatpush1.msra.mxu0 0.0
        %782 = vmatprep.mubr.f32.mxu0 0.0
        %783 = vmatmul.mubr.f32.gmra.mrb[0].mxu0 %v716
        %v784 = vpop.f32.mrb[0].mxu0
        %v785 = vadd.f32 0.0, %v784
        %v786 = vpop.f32.mrb[0].mxu0
        %787 = vdwg.mxu0
        %788 = vrot.lane.b32.xlu0 %v608, 120
        %v789 = vpop.permute.xlu0 %788
        %790 = vrot.lane.b32.xlu0 %v608, 88
        %v791 = vpop.permute.xlu0 %790
        %v792 = vsel %vm618, %v789, 0
        %v794 = vsel %vm618, %v791, 0
        %796 = vmatprep.subr.mxu0 0.0
        %797 = vmatpush1.xpose.msra.mxu0 %v794
        %798 = vmatprep.subr.mxu0 0.0
        %799 = vmatpush1.xpose.msra.mxu0 0.0
        %800 = vmatprep.subr.mxu0 0.0
        %801 = vmatpush1.xpose.msra.mxu0 0.0
        %802 = vmatprep.subr.mxu0 0.0
        %803 = vmatpush1.xpose.msra.mxu0 0.0
        %804 = vmatprep.subr.mxu0 0.0
        %805 = vmatpush1.xpose.msra.mxu0 0.0
        %806 = vmatprep.subr.mxu0 0.0
        %807 = vmatpush1.xpose.msra.mxu0 0.0
        %808 = vmatprep.subr.mxu0 0.0
        %809 = vmatpush1.xpose.msra.mxu0 0.0
        %810 = vmatprep.subr.mxu0 0.0
        %811 = vmatpush1.xpose.msra.mxu0 0.0
        %812 = vmatprep.subr.mxu0 0.0
        %813 = vmatpush1.xpose.msra.mxu0 0.0
        %814 = vmatprep.subr.mxu0 0.0
        %815 = vmatpush1.xpose.msra.mxu0 0.0
        %816 = vmatprep.subr.mxu0 0.0
        %817 = vmatpush1.xpose.msra.mxu0 0.0
        %818 = vmatprep.subr.mxu0 0.0
        %819 = vmatpush1.xpose.msra.mxu0 0.0
        %820 = vmatprep.subr.mxu0 0.0
        %821 = vmatpush1.xpose.msra.mxu0 0.0
        %822 = vmatprep.subr.mxu0 0.0
        %823 = vmatpush1.xpose.msra.mxu0 0.0
        %824 = vmatprep.subr.mxu0 0.0
        %825 = vmatpush1.xpose.msra.mxu0 0.0
        %826 = vmatprep.subr.mxu0 0.0
        %827 = vmatpush1.xpose.msra.mxu0 0.0
        %828 = vmatprep.subr.mxu0 0.0
        %829 = vmatpush1.xpose.msra.mxu0 0.0
        %830 = vmatprep.subr.mxu0 0.0
        %831 = vmatpush1.xpose.msra.mxu0 0.0
        %832 = vmatprep.subr.mxu0 0.0
        %833 = vmatpush1.xpose.msra.mxu0 0.0
        %834 = vmatprep.subr.mxu0 0.0
        %835 = vmatpush1.xpose.msra.mxu0 0.0
        %836 = vmatprep.subr.mxu0 0.0
        %837 = vmatpush1.xpose.msra.mxu0 0.0
        %838 = vmatprep.subr.mxu0 0.0
        %839 = vmatpush1.xpose.msra.mxu0 0.0
        %840 = vmatprep.subr.mxu0 0.0
        %841 = vmatpush1.xpose.msra.mxu0 0.0
        %842 = vmatprep.subr.mxu0 0.0
        %843 = vmatpush1.xpose.msra.mxu0 0.0
        %844 = vmatprep.subr.mxu0 0.0
        %845 = vmatpush1.xpose.msra.mxu0 0.0
        %846 = vmatprep.subr.mxu0 0.0
        %847 = vmatpush1.xpose.msra.mxu0 0.0
        %848 = vmatprep.subr.mxu0 0.0
        %849 = vmatpush1.xpose.msra.mxu0 0.0
        %850 = vmatprep.subr.mxu0 0.0
        %851 = vmatpush1.xpose.msra.mxu0 0.0
        %852 = vmatprep.subr.mxu0 0.0
        %853 = vmatpush1.xpose.msra.mxu0 0.0
        %854 = vmatprep.subr.mxu0 0.0
        %855 = vmatpush1.xpose.msra.mxu0 0.0
        %856 = vmatprep.subr.mxu0 0.0
        %857 = vmatpush1.xpose.msra.mxu0 0.0
        %858 = vmatprep.subr.mxu0 0.0
        %859 = vmatpush1.xpose.msra.mxu0 0.0
        %860 = vmatprep.mubr.f32.mxu0 0.0
        %861 = vmatmul.mubr.f32.gmra.mrb[0].mxu0 %v792
        %v862 = vpop.f32.mrb[0].mxu0
        %v863 = vadd.f32 0.0, %v862
        %v864 = vpop.f32.mrb[0].mxu0
        %865 = vdwg.mxu0
        %v866 = vmul.f32 %v863, 0.35355338
        %v867 = vadd.f32 %v866, %v698
        %v868 = vsel %vm618, %v867, -inf
        %869 = vmax.xlane.f32.xlu0 %v868
        %v870 = vpop.xlane.xlu0 %869
        %v871 = vsub.f32 %v867, %v870
        %v872 = vmul.f32 %v871, 1.442695
        %v873 = vpow.pop %v872
        %v874 = vsel %vm618, %v873, 0.0
        %875 = vadd.xlane.f32.xlu0 %v874
        %v876 = vpop.xlane.xlu0 %875
        %v877 = vrcp.pop %v876
        %v878 = vmul.f32 %v873, %v877
        %879 = vrot.lane.b32.xlu0 %v608, 56
        %v880 = vpop.permute.xlu0 %879
        %v883 = vsel %vm618, %v878, 0
        %885 = vmatprep.subr.mxu0 0.0
        %886 = vmatpush1.msra.mxu0 %v880
        %887 = vmatprep.subr.mxu0 0.0
        %888 = vmatpush1.msra.mxu0 0.0
        %889 = vmatprep.subr.mxu0 0.0
        %890 = vmatpush1.msra.mxu0 0.0
        %891 = vmatprep.subr.mxu0 0.0
        %892 = vmatpush1.msra.mxu0 0.0
        %893 = vmatprep.subr.mxu0 0.0
        %894 = vmatpush1.msra.mxu0 0.0
        %895 = vmatprep.subr.mxu0 0.0
        %896 = vmatpush1.msra.mxu0 0.0
        %897 = vmatprep.subr.mxu0 0.0
        %898 = vmatpush1.msra.mxu0 0.0
        %899 = vmatprep.subr.mxu0 0.0
        %900 = vmatpush1.msra.mxu0 0.0
        %901 = vmatprep.subr.mxu0 0.0
        %902 = vmatpush1.msra.mxu0 0.0
        %903 = vmatprep.subr.mxu0 0.0
        %904 = vmatpush1.msra.mxu0 0.0
        %905 = vmatprep.subr.mxu0 0.0
        %906 = vmatpush1.msra.mxu0 0.0
        %907 = vmatprep.subr.mxu0 0.0
        %908 = vmatpush1.msra.mxu0 0.0
        %909 = vmatprep.subr.mxu0 0.0
        %910 = vmatpush1.msra.mxu0 0.0
        %911 = vmatprep.subr.mxu0 0.0
        %912 = vmatpush1.msra.mxu0 0.0
        %913 = vmatprep.subr.mxu0 0.0
        %914 = vmatpush1.msra.mxu0 0.0
        %915 = vmatprep.subr.mxu0 0.0
        %916 = vmatpush1.msra.mxu0 0.0
        %917 = vmatprep.subr.mxu0 0.0
        %918 = vmatpush1.msra.mxu0 0.0
        %919 = vmatprep.subr.mxu0 0.0
        %920 = vmatpush1.msra.mxu0 0.0
        %921 = vmatprep.subr.mxu0 0.0
        %922 = vmatpush1.msra.mxu0 0.0
        %923 = vmatprep.subr.mxu0 0.0
        %924 = vmatpush1.msra.mxu0 0.0
        %925 = vmatprep.subr.mxu0 0.0
        %926 = vmatpush1.msra.mxu0 0.0
        %927 = vmatprep.subr.mxu0 0.0
        %928 = vmatpush1.msra.mxu0 0.0
        %929 = vmatprep.subr.mxu0 0.0
        %930 = vmatpush1.msra.mxu0 0.0
        %931 = vmatprep.subr.mxu0 0.0
        %932 = vmatpush1.msra.mxu0 0.0
        %933 = vmatprep.subr.mxu0 0.0
        %934 = vmatpush1.msra.mxu0 0.0
        %935 = vmatprep.subr.mxu0 0.0
        %936 = vmatpush1.msra.mxu0 0.0
        %937 = vmatprep.subr.mxu0 0.0
        %938 = vmatpush1.msra.mxu0 0.0
        %939 = vmatprep.subr.mxu0 0.0
        %940 = vmatpush1.msra.mxu0 0.0
        %941 = vmatprep.subr.mxu0 0.0
        %942 = vmatpush1.msra.mxu0 0.0
        %943 = vmatprep.subr.mxu0 0.0
        %944 = vmatpush1.msra.mxu0 0.0
        %945 = vmatprep.subr.mxu0 0.0
        %946 = vmatpush1.msra.mxu0 0.0
        %947 = vmatprep.subr.mxu0 0.0
        %948 = vmatpush1.msra.mxu0 0.0
        %949 = vmatprep.mubr.f32.mxu0 0.0
        %950 = vmatmul.mubr.f32.gmra.mrb[0].mxu0 %v883
        %v951 = vpop.f32.mrb[0].mxu0
        %v952 = vadd.f32 0.0, %v951
        %v953 = vpop.f32.mrb[0].mxu0
        %954 = vdwg.mxu0
        %v956 = vsel %vm618, %v952, 0
        %958 = vmatprep.subr.mxu0 0.0
        %959 = vmatpush1.msra.mxu0 %v612
        %960 = vmatprep.subr.mxu0 0.0
        %961 = vmatpush1.msra.mxu0 0.0
        %962 = vmatprep.subr.mxu0 0.0
        %963 = vmatpush1.msra.mxu0 0.0
        %964 = vmatprep.subr.mxu0 0.0
        %965 = vmatpush1.msra.mxu0 0.0
        %966 = vmatprep.subr.mxu0 0.0
        %967 = vmatpush1.msra.mxu0 0.0
        %968 = vmatprep.subr.mxu0 0.0
        %969 = vmatpush1.msra.mxu0 0.0
        %970 = vmatprep.subr.mxu0 0.0
        %971 = vmatpush1.msra.mxu0 0.0
        %972 = vmatprep.subr.mxu0 0.0
        %973 = vmatpush1.msra.mxu0 0.0
        %974 = vmatprep.subr.mxu0 0.0
        %975 = vmatpush1.msra.mxu0 0.0
        %976 = vmatprep.subr.mxu0 0.0
        %977 = vmatpush1.msra.mxu0 0.0
        %978 = vmatprep.subr.mxu0 0.0
        %979 = vmatpush1.msra.mxu0 0.0
        %980 = vmatprep.subr.mxu0 0.0
        %981 = vmatpush1.msra.mxu0 0.0
        %982 = vmatprep.subr.mxu0 0.0
        %983 = vmatpush1.msra.mxu0 0.0
        %984 = vmatprep.subr.mxu0 0.0
        %985 = vmatpush1.msra.mxu0 0.0
        %986 = vmatprep.subr.mxu0 0.0
        %987 = vmatpush1.msra.mxu0 0.0
        %988 = vmatprep.subr.mxu0 0.0
        %989 = vmatpush1.msra.mxu0 0.0
        %990 = vmatprep.subr.mxu0 0.0
        %991 = vmatpush1.msra.mxu0 0.0
        %992 = vmatprep.subr.mxu0 0.0
        %993 = vmatpush1.msra.mxu0 0.0
        %994 = vmatprep.subr.mxu0 0.0
        %995 = vmatpush1.msra.mxu0 0.0
        %996 = vmatprep.subr.mxu0 0.0
        %997 = vmatpush1.msra.mxu0 0.0
        %998 = vmatprep.subr.mxu0 0.0
        %999 = vmatpush1.msra.mxu0 0.0
        %1000 = vmatprep.subr.mxu0 0.0
        %1001 = vmatpush1.msra.mxu0 0.0
        %1002 = vmatprep.subr.mxu0 0.0
        %1003 = vmatpush1.msra.mxu0 0.0
        %1004 = vmatprep.subr.mxu0 0.0
        %1005 = vmatpush1.msra.mxu0 0.0
        %1006 = vmatprep.subr.mxu0 0.0
        %1007 = vmatpush1.msra.mxu0 0.0
        %1008 = vmatprep.subr.mxu0 0.0
        %1009 = vmatpush1.msra.mxu0 0.0
        %1010 = vmatprep.subr.mxu0 0.0
        %1011 = vmatpush1.msra.mxu0 0.0
        %1012 = vmatprep.subr.mxu0 0.0
        %1013 = vmatpush1.msra.mxu0 0.0
        %1014 = vmatprep.subr.mxu0 0.0
        %1015 = vmatpush1.msra.mxu0 0.0
        %1016 = vmatprep.subr.mxu0 0.0
        %1017 = vmatpush1.msra.mxu0 0.0
        %1018 = vmatprep.subr.mxu0 0.0
        %1019 = vmatpush1.msra.mxu0 0.0
        %1020 = vmatprep.subr.mxu0 0.0
        %1021 = vmatpush1.msra.mxu0 0.0
        %1022 = vmatprep.mubr.f32.mxu0 0.0
        %1023 = vmatmul.mubr.f32.gmra.mrb[0].mxu0 %v956
        %v1024 = vpop.f32.mrb[0].mxu0
        %v1025 = vadd.f32 0.0, %v1024
        %v1026 = vpop.f32.mrb[0].mxu0
        %1027 = vdwg.mxu0
        %v1029 = vsel %vm618, %v785, 0
        %1031 = vmatprep.subr.mxu0 0.0
        %1032 = vmatpush1.msra.mxu0 %v611
        %1033 = vmatprep.subr.mxu0 0.0
        %1034 = vmatpush1.msra.mxu0 0.0
        %1035 = vmatprep.subr.mxu0 0.0
        %1036 = vmatpush1.msra.mxu0 0.0
        %1037 = vmatprep.subr.mxu0 0.0
        %1038 = vmatpush1.msra.mxu0 0.0
        %1039 = vmatprep.subr.mxu0 0.0
        %1040 = vmatpush1.msra.mxu0 0.0
        %1041 = vmatprep.subr.mxu0 0.0
        %1042 = vmatpush1.msra.mxu0 0.0
        %1043 = vmatprep.subr.mxu0 0.0
        %1044 = vmatpush1.msra.mxu0 0.0
        %1045 = vmatprep.subr.mxu0 0.0
        %1046 = vmatpush1.msra.mxu0 0.0
        %1047 = vmatprep.subr.mxu0 0.0
        %1048 = vmatpush1.msra.mxu0 0.0
        %1049 = vmatprep.subr.mxu0 0.0
        %1050 = vmatpush1.msra.mxu0 0.0
        %1051 = vmatprep.subr.mxu0 0.0
        %1052 = vmatpush1.msra.mxu0 0.0
        %1053 = vmatprep.subr.mxu0 0.0
        %1054 = vmatpush1.msra.mxu0 0.0
        %1055 = vmatprep.subr.mxu0 0.0
        %1056 = vmatpush1.msra.mxu0 0.0
        %1057 = vmatprep.subr.mxu0 0.0
        %1058 = vmatpush1.msra.mxu0 0.0
        %1059 = vmatprep.subr.mxu0 0.0
        %1060 = vmatpush1.msra.mxu0 0.0
        %1061 = vmatprep.subr.mxu0 0.0
        %1062 = vmatpush1.msra.mxu0 0.0
        %1063 = vmatprep.subr.mxu0 0.0
        %1064 = vmatpush1.msra.mxu0 0.0
        %1065 = vmatprep.subr.mxu0 0.0
        %1066 = vmatpush1.msra.mxu0 0.0
        %1067 = vmatprep.subr.mxu0 0.0
        %1068 = vmatpush1.msra.mxu0 0.0
        %1069 = vmatprep.subr.mxu0 0.0
        %1070 = vmatpush1.msra.mxu0 0.0
        %1071 = vmatprep.subr.mxu0 0.0
        %1072 = vmatpush1.msra.mxu0 0.0
        %1073 = vmatprep.subr.mxu0 0.0
        %1074 = vmatpush1.msra.mxu0 0.0
        %1075 = vmatprep.subr.mxu0 0.0
        %1076 = vmatpush1.msra.mxu0 0.0
        %1077 = vmatprep.subr.mxu0 0.0
        %1078 = vmatpush1.msra.mxu0 0.0
        %1079 = vmatprep.subr.mxu0 0.0
        %1080 = vmatpush1.msra.mxu0 0.0
        %1081 = vmatprep.subr.mxu0 0.0
        %1082 = vmatpush1.msra.mxu0 0.0
        %1083 = vmatprep.subr.mxu0 0.0
        %1084 = vmatpush1.msra.mxu0 0.0
        %1085 = vmatprep.subr.mxu0 0.0
        %1086 = vmatpush1.msra.mxu0 0.0
        %1087 = vmatprep.subr.mxu0 0.0
        %1088 = vmatpush1.msra.mxu0 0.0
        %1089 = vmatprep.subr.mxu0 0.0
        %1090 = vmatpush1.msra.mxu0 0.0
        %1091 = vmatprep.subr.mxu0 0.0
        %1092 = vmatpush1.msra.mxu0 0.0
        %1093 = vmatprep.subr.mxu0 0.0
        %1094 = vmatpush1.msra.mxu0 0.0
        %1095 = vmatprep.mubr.f32.mxu0 0.0
        %1096 = vmatmul.mubr.f32.gmra.mrb[0].mxu0 %v1029
        %v1097 = vpop.f32.mrb[0].mxu0
        %v1098 = vadd.f32 %v1025, %v1097
        %v1099 = vpop.f32.mrb[0].mxu0
        %1100 = vdwg.mxu0
        %1101 = vrot.lane.b32.xlu0 %v608, 112
        %v1102 = vpop.permute.xlu0 %1101
        %1103 = vrot.lane.b32.xlu0 %v608, 80
        %v1104 = vpop.permute.xlu0 %1103
        %v1105 = vsel %vm618, %v1102, 0
        %v1107 = vsel %vm618, %v1104, 0
        %1109 = vmatprep.subr.mxu0 0.0
        %1110 = vmatpush1.xpose.msra.mxu0 %v1107
        %1111 = vmatprep.subr.mxu0 0.0
        %1112 = vmatpush1.xpose.msra.mxu0 0.0
        %1113 = vmatprep.subr.mxu0 0.0
        %1114 = vmatpush1.xpose.msra.mxu0 0.0
        %1115 = vmatprep.subr.mxu0 0.0
        %1116 = vmatpush1.xpose.msra.mxu0 0.0
        %1117 = vmatprep.subr.mxu0 0.0
        %1118 = vmatpush1.xpose.msra.mxu0 0.0
        %1119 = vmatprep.subr.mxu0 0.0
        %1120 = vmatpush1.xpose.msra.mxu0 0.0
        %1121 = vmatprep.subr.mxu0 0.0
        %1122 = vmatpush1.xpose.msra.mxu0 0.0
        %1123 = vmatprep.subr.mxu0 0.0
        %1124 = vmatpush1.xpose.msra.mxu0 0.0
        %1125 = vmatprep.subr.mxu0 0.0
        %1126 = vmatpush1.xpose.msra.mxu0 0.0
        %1127 = vmatprep.subr.mxu0 0.0
        %1128 = vmatpush1.xpose.msra.mxu0 0.0
        %1129 = vmatprep.subr.mxu0 0.0
        %1130 = vmatpush1.xpose.msra.mxu0 0.0
        %1131 = vmatprep.subr.mxu0 0.0
        %1132 = vmatpush1.xpose.msra.mxu0 0.0
        %1133 = vmatprep.subr.mxu0 0.0
        %1134 = vmatpush1.xpose.msra.mxu0 0.0
        %1135 = vmatprep.subr.mxu0 0.0
        %1136 = vmatpush1.xpose.msra.mxu0 0.0
        %1137 = vmatprep.subr.mxu0 0.0
        %1138 = vmatpush1.xpose.msra.mxu0 0.0
        %1139 = vmatprep.subr.mxu0 0.0
        %1140 = vmatpush1.xpose.msra.mxu0 0.0
        %1141 = vmatprep.subr.mxu0 0.0
        %1142 = vmatpush1.xpose.msra.mxu0 0.0
        %1143 = vmatprep.subr.mxu0 0.0
        %1144 = vmatpush1.xpose.msra.mxu0 0.0
        %1145 = vmatprep.subr.mxu0 0.0
        %1146 = vmatpush1.xpose.msra.mxu0 0.0
        %1147 = vmatprep.subr.mxu0 0.0
        %1148 = vmatpush1.xpose.msra.mxu0 0.0
        %1149 = vmatprep.subr.mxu0 0.0
        %1150 = vmatpush1.xpose.msra.mxu0 0.0
        %1151 = vmatprep.subr.mxu0 0.0
        %1152 = vmatpush1.xpose.msra.mxu0 0.0
        %1153 = vmatprep.subr.mxu0 0.0
        %1154 = vmatpush1.xpose.msra.mxu0 0.0
        %1155 = vmatprep.subr.mxu0 0.0
        %1156 = vmatpush1.xpose.msra.mxu0 0.0
        %1157 = vmatprep.subr.mxu0 0.0
        %1158 = vmatpush1.xpose.msra.mxu0 0.0
        %1159 = vmatprep.subr.mxu0 0.0
        %1160 = vmatpush1.xpose.msra.mxu0 0.0
        %1161 = vmatprep.subr.mxu0 0.0
        %1162 = vmatpush1.xpose.msra.mxu0 0.0
        %1163 = vmatprep.subr.mxu0 0.0
        %1164 = vmatpush1.xpose.msra.mxu0 0.0
        %1165 = vmatprep.subr.mxu0 0.0
        %1166 = vmatpush1.xpose.msra.mxu0 0.0
        %1167 = vmatprep.subr.mxu0 0.0
        %1168 = vmatpush1.xpose.msra.mxu0 0.0
        %1169 = vmatprep.subr.mxu0 0.0
        %1170 = vmatpush1.xpose.msra.mxu0 0.0
        %1171 = vmatprep.subr.mxu0 0.0
        %1172 = vmatpush1.xpose.msra.mxu0 0.0
        %1173 = vmatprep.mubr.f32.mxu0 0.0
        %1174 = vmatmul.mubr.f32.gmra.mrb[0].mxu0 %v1105
        %v1175 = vpop.f32.mrb[0].mxu0
        %v1176 = vadd.f32 0.0, %v1175
        %v1177 = vpop.f32.mrb[0].mxu0
        %1178 = vdwg.mxu0
        %v1179 = vmul.f32 %v1176, 0.35355338
        %v1180 = vadd.f32 %v1179, %v698
        %v1181 = vsel %vm618, %v1180, -inf
        %1182 = vmax.xlane.f32.xlu0 %v1181
        %v1183 = vpop.xlane.xlu0 %1182
        %v1184 = vsub.f32 %v1180, %v1183
        %v1185 = vmul.f32 %v1184, 1.442695
        %v1186 = vpow.pop %v1185
        %v1187 = vsel %vm618, %v1186, 0.0
        %1188 = vadd.xlane.f32.xlu0 %v1187
        %v1189 = vpop.xlane.xlu0 %1188
        %v1190 = vrcp.pop %v1189
        %v1191 = vmul.f32 %v1186, %v1190
        %1192 = vrot.lane.b32.xlu0 %v608, 48
        %v1193 = vpop.permute.xlu0 %1192
        %v1196 = vsel %vm618, %v1191, 0
        %1198 = vmatprep.subr.mxu0 0.0
        %1199 = vmatpush1.msra.mxu0 %v1193
        %1200 = vmatprep.subr.mxu0 0.0
        %1201 = vmatpush1.msra.mxu0 0.0
        %1202 = vmatprep.subr.mxu0 0.0
        %1203 = vmatpush1.msra.mxu0 0.0
        %1204 = vmatprep.subr.mxu0 0.0
        %1205 = vmatpush1.msra.mxu0 0.0
        %1206 = vmatprep.subr.mxu0 0.0
        %1207 = vmatpush1.msra.mxu0 0.0
        %1208 = vmatprep.subr.mxu0 0.0
        %1209 = vmatpush1.msra.mxu0 0.0
        %1210 = vmatprep.subr.mxu0 0.0
        %1211 = vmatpush1.msra.mxu0 0.0
        %1212 = vmatprep.subr.mxu0 0.0
        %1213 = vmatpush1.msra.mxu0 0.0
        %1214 = vmatprep.subr.mxu0 0.0
        %1215 = vmatpush1.msra.mxu0 0.0
        %1216 = vmatprep.subr.mxu0 0.0
        %1217 = vmatpush1.msra.mxu0 0.0
        %1218 = vmatprep.subr.mxu0 0.0
        %1219 = vmatpush1.msra.mxu0 0.0
        %1220 = vmatprep.subr.mxu0 0.0
        %1221 = vmatpush1.msra.mxu0 0.0
        %1222 = vmatprep.subr.mxu0 0.0
        %1223 = vmatpush1.msra.mxu0 0.0
        %1224 = vmatprep.subr.mxu0 0.0
        %1225 = vmatpush1.msra.mxu0 0.0
        %1226 = vmatprep.subr.mxu0 0.0
        %1227 = vmatpush1.msra.mxu0 0.0
        %1228 = vmatprep.subr.mxu0 0.0
        %1229 = vmatpush1.msra.mxu0 0.0
        %1230 = vmatprep.subr.mxu0 0.0
        %1231 = vmatpush1.msra.mxu0 0.0
        %1232 = vmatprep.subr.mxu0 0.0
        %1233 = vmatpush1.msra.mxu0 0.0
        %1234 = vmatprep.subr.mxu0 0.0
        %1235 = vmatpush1.msra.mxu0 0.0
        %1236 = vmatprep.subr.mxu0 0.0
        %1237 = vmatpush1.msra.mxu0 0.0
        %1238 = vmatprep.subr.mxu0 0.0
        %1239 = vmatpush1.msra.mxu0 0.0
        %1240 = vmatprep.subr.mxu0 0.0
        %1241 = vmatpush1.msra.mxu0 0.0
        %1242 = vmatprep.subr.mxu0 0.0
        %1243 = vmatpush1.msra.mxu0 0.0
        %1244 = vmatprep.subr.mxu0 0.0
        %1245 = vmatpush1.msra.mxu0 0.0
        %1246 = vmatprep.subr.mxu0 0.0
        %1247 = vmatpush1.msra.mxu0 0.0
        %1248 = vmatprep.subr.mxu0 0.0
        %1249 = vmatpush1.msra.mxu0 0.0
        %1250 = vmatprep.subr.mxu0 0.0
        %1251 = vmatpush1.msra.mxu0 0.0
        %1252 = vmatprep.subr.mxu0 0.0
        %1253 = vmatpush1.msra.mxu0 0.0
        %1254 = vmatprep.subr.mxu0 0.0
        %1255 = vmatpush1.msra.mxu0 0.0
        %1256 = vmatprep.subr.mxu0 0.0
        %1257 = vmatpush1.msra.mxu0 0.0
        %1258 = vmatprep.subr.mxu0 0.0
        %1259 = vmatpush1.msra.mxu0 0.0
        %1260 = vmatprep.subr.mxu0 0.0
        %1261 = vmatpush1.msra.mxu0 0.0
        %1262 = vmatprep.mubr.f32.mxu0 0.0
        %1263 = vmatmul.mubr.f32.gmra.mrb[0].mxu0 %v1196
        %v1264 = vpop.f32.mrb[0].mxu0
        %v1265 = vadd.f32 0.0, %v1264
        %v1266 = vpop.f32.mrb[0].mxu0
        %1267 = vdwg.mxu0
        %v1269 = vsel %vm618, %v1265, 0
        %1271 = vmatprep.subr.mxu0 0.0
        %1272 = vmatpush1.msra.mxu0 %v613
        %1273 = vmatprep.subr.mxu0 0.0
        %1274 = vmatpush1.msra.mxu0 0.0
        %1275 = vmatprep.subr.mxu0 0.0
        %1276 = vmatpush1.msra.mxu0 0.0
        %1277 = vmatprep.subr.mxu0 0.0
        %1278 = vmatpush1.msra.mxu0 0.0
        %1279 = vmatprep.subr.mxu0 0.0
        %1280 = vmatpush1.msra.mxu0 0.0
        %1281 = vmatprep.subr.mxu0 0.0
        %1282 = vmatpush1.msra.mxu0 0.0
        %1283 = vmatprep.subr.mxu0 0.0
        %1284 = vmatpush1.msra.mxu0 0.0
        %1285 = vmatprep.subr.mxu0 0.0
        %1286 = vmatpush1.msra.mxu0 0.0
        %1287 = vmatprep.subr.mxu0 0.0
        %1288 = vmatpush1.msra.mxu0 0.0
        %1289 = vmatprep.subr.mxu0 0.0
        %1290 = vmatpush1.msra.mxu0 0.0
        %1291 = vmatprep.subr.mxu0 0.0
        %1292 = vmatpush1.msra.mxu0 0.0
        %1293 = vmatprep.subr.mxu0 0.0
        %1294 = vmatpush1.msra.mxu0 0.0
        %1295 = vmatprep.subr.mxu0 0.0
        %1296 = vmatpush1.msra.mxu0 0.0
        %1297 = vmatprep.subr.mxu0 0.0
        %1298 = vmatpush1.msra.mxu0 0.0
        %1299 = vmatprep.subr.mxu0 0.0
        %1300 = vmatpush1.msra.mxu0 0.0
        %1301 = vmatprep.subr.mxu0 0.0
        %1302 = vmatpush1.msra.mxu0 0.0
        %1303 = vmatprep.subr.mxu0 0.0
        %1304 = vmatpush1.msra.mxu0 0.0
        %1305 = vmatprep.subr.mxu0 0.0
        %1306 = vmatpush1.msra.mxu0 0.0
        %1307 = vmatprep.subr.mxu0 0.0
        %1308 = vmatpush1.msra.mxu0 0.0
        %1309 = vmatprep.subr.mxu0 0.0
        %1310 = vmatpush1.msra.mxu0 0.0
        %1311 = vmatprep.subr.mxu0 0.0
        %1312 = vmatpush1.msra.mxu0 0.0
        %1313 = vmatprep.subr.mxu0 0.0
        %1314 = vmatpush1.msra.mxu0 0.0
        %1315 = vmatprep.subr.mxu0 0.0
        %1316 = vmatpush1.msra.mxu0 0.0
        %1317 = vmatprep.subr.mxu0 0.0
        %1318 = vmatpush1.msra.mxu0 0.0
        %1319 = vmatprep.subr.mxu0 0.0
        %1320 = vmatpush1.msra.mxu0 0.0
        %1321 = vmatprep.subr.mxu0 0.0
        %1322 = vmatpush1.msra.mxu0 0.0
        %1323 = vmatprep.subr.mxu0 0.0
        %1324 = vmatpush1.msra.mxu0 0.0
        %1325 = vmatprep.subr.mxu0 0.0
        %1326 = vmatpush1.msra.mxu0 0.0
        %1327 = vmatprep.subr.mxu0 0.0
        %1328 = vmatpush1.msra.mxu0 0.0
        %1329 = vmatprep.subr.mxu0 0.0
        %1330 = vmatpush1.msra.mxu0 0.0
        %1331 = vmatprep.subr.mxu0 0.0
        %1332 = vmatpush1.msra.mxu0 0.0
        %1333 = vmatprep.subr.mxu0 0.0
        %1334 = vmatpush1.msra.mxu0 0.0
        %1335 = vmatprep.mubr.f32.mxu0 0.0
        %1336 = vmatmul.mubr.f32.gmra.mrb[0].mxu0 %v1269
        %v1337 = vpop.f32.mrb[0].mxu0
        %v1338 = vadd.f32 0.0, %v1337
        %v1339 = vpop.f32.mrb[0].mxu0
        %1340 = vdwg.mxu0
        %v1341 = vadd.f32 %v1098, %v1338
        %1342 = vrot.lane.b32.xlu0 %v608, 104
        %v1343 = vpop.permute.xlu0 %1342
        %1344 = vrot.lane.b32.xlu0 %v608, 72
        %v1345 = vpop.permute.xlu0 %1344
        %v1346 = vsel %vm618, %v1343, 0
        %v1348 = vsel %vm618, %v1345, 0
        %1350 = vmatprep.subr.mxu0 0.0
        %1351 = vmatpush1.xpose.msra.mxu0 %v1348
        %1352 = vmatprep.subr.mxu0 0.0
        %1353 = vmatpush1.xpose.msra.mxu0 0.0
        %1354 = vmatprep.subr.mxu0 0.0
        %1355 = vmatpush1.xpose.msra.mxu0 0.0
        %1356 = vmatprep.subr.mxu0 0.0
        %1357 = vmatpush1.xpose.msra.mxu0 0.0
        %1358 = vmatprep.subr.mxu0 0.0
        %1359 = vmatpush1.xpose.msra.mxu0 0.0
        %1360 = vmatprep.subr.mxu0 0.0
        %1361 = vmatpush1.xpose.msra.mxu0 0.0
        %1362 = vmatprep.subr.mxu0 0.0
        %1363 = vmatpush1.xpose.msra.mxu0 0.0
        %1364 = vmatprep.subr.mxu0 0.0
        %1365 = vmatpush1.xpose.msra.mxu0 0.0
        %1366 = vmatprep.subr.mxu0 0.0
        %1367 = vmatpush1.xpose.msra.mxu0 0.0
        %1368 = vmatprep.subr.mxu0 0.0
        %1369 = vmatpush1.xpose.msra.mxu0 0.0
        %1370 = vmatprep.subr.mxu0 0.0
        %1371 = vmatpush1.xpose.msra.mxu0 0.0
        %1372 = vmatprep.subr.mxu0 0.0
        %1373 = vmatpush1.xpose.msra.mxu0 0.0
        %1374 = vmatprep.subr.mxu0 0.0
        %1375 = vmatpush1.xpose.msra.mxu0 0.0
        %1376 = vmatprep.subr.mxu0 0.0
        %1377 = vmatpush1.xpose.msra.mxu0 0.0
        %1378 = vmatprep.subr.mxu0 0.0
        %1379 = vmatpush1.xpose.msra.mxu0 0.0
        %1380 = vmatprep.subr.mxu0 0.0
        %1381 = vmatpush1.xpose.msra.mxu0 0.0
        %1382 = vmatprep.subr.mxu0 0.0
        %1383 = vmatpush1.xpose.msra.mxu0 0.0
        %1384 = vmatprep.subr.mxu0 0.0
        %1385 = vmatpush1.xpose.msra.mxu0 0.0
        %1386 = vmatprep.subr.mxu0 0.0
        %1387 = vmatpush1.xpose.msra.mxu0 0.0
        %1388 = vmatprep.subr.mxu0 0.0
        %1389 = vmatpush1.xpose.msra.mxu0 0.0
        %1390 = vmatprep.subr.mxu0 0.0
        %1391 = vmatpush1.xpose.msra.mxu0 0.0
        %1392 = vmatprep.subr.mxu0 0.0
        %1393 = vmatpush1.xpose.msra.mxu0 0.0
        %1394 = vmatprep.subr.mxu0 0.0
        %1395 = vmatpush1.xpose.msra.mxu0 0.0
        %1396 = vmatprep.subr.mxu0 0.0
        %1397 = vmatpush1.xpose.msra.mxu0 0.0
        %1398 = vmatprep.subr.mxu0 0.0
        %1399 = vmatpush1.xpose.msra.mxu0 0.0
        %1400 = vmatprep.subr.mxu0 0.0
        %1401 = vmatpush1.xpose.msra.mxu0 0.0
        %1402 = vmatprep.subr.mxu0 0.0
        %1403 = vmatpush1.xpose.msra.mxu0 0.0
        %1404 = vmatprep.subr.mxu0 0.0
        %1405 = vmatpush1.xpose.msra.mxu0 0.0
        %1406 = vmatprep.subr.mxu0 0.0
        %1407 = vmatpush1.xpose.msra.mxu0 0.0
        %1408 = vmatprep.subr.mxu0 0.0
        %1409 = vmatpush1.xpose.msra.mxu0 0.0
        %1410 = vmatprep.subr.mxu0 0.0
        %1411 = vmatpush1.xpose.msra.mxu0 0.0
        %1412 = vmatprep.subr.mxu0 0.0
        %1413 = vmatpush1.xpose.msra.mxu0 0.0
        %1414 = vmatprep.mubr.f32.mxu0 0.0
        %1415 = vmatmul.mubr.f32.gmra.mrb[0].mxu0 %v1346
        %v1416 = vpop.f32.mrb[0].mxu0
        %v1417 = vadd.f32 0.0, %v1416
        %v1418 = vpop.f32.mrb[0].mxu0
        %1419 = vdwg.mxu0
        %v1420 = vmul.f32 %v1417, 0.35355338
        %v1421 = vadd.f32 %v1420, %v698
        %v1422 = vsel %vm618, %v1421, -inf
        %1423 = vmax.xlane.f32.xlu0 %v1422
        %v1424 = vpop.xlane.xlu0 %1423
        %v1425 = vsub.f32 %v1421, %v1424
        %v1426 = vmul.f32 %v1425, 1.442695
        %v1427 = vpow.pop %v1426
        %v1428 = vsel %vm618, %v1427, 0.0
        %1429 = vadd.xlane.f32.xlu0 %v1428
        %v1430 = vpop.xlane.xlu0 %1429
        %v1431 = vrcp.pop %v1430
        %v1432 = vmul.f32 %v1427, %v1431
        %1433 = vrot.lane.b32.xlu0 %v608, 40
        %v1434 = vpop.permute.xlu0 %1433
        %v1437 = vsel %vm618, %v1432, 0
        %1439 = vmatprep.subr.mxu0 0.0
        %1440 = vmatpush1.msra.mxu0 %v1434
        %1441 = vmatprep.subr.mxu0 0.0
        %1442 = vmatpush1.msra.mxu0 0.0
        %1443 = vmatprep.subr.mxu0 0.0
        %1444 = vmatpush1.msra.mxu0 0.0
        %1445 = vmatprep.subr.mxu0 0.0
        %1446 = vmatpush1.msra.mxu0 0.0
        %1447 = vmatprep.subr.mxu0 0.0
        %1448 = vmatpush1.msra.mxu0 0.0
        %1449 = vmatprep.subr.mxu0 0.0
        %1450 = vmatpush1.msra.mxu0 0.0
        %1451 = vmatprep.subr.mxu0 0.0
        %1452 = vmatpush1.msra.mxu0 0.0
        %1453 = vmatprep.subr.mxu0 0.0
        %1454 = vmatpush1.msra.mxu0 0.0
        %1455 = vmatprep.subr.mxu0 0.0
        %1456 = vmatpush1.msra.mxu0 0.0
        %1457 = vmatprep.subr.mxu0 0.0
        %1458 = vmatpush1.msra.mxu0 0.0
        %1459 = vmatprep.subr.mxu0 0.0
        %1460 = vmatpush1.msra.mxu0 0.0
        %1461 = vmatprep.subr.mxu0 0.0
        %1462 = vmatpush1.msra.mxu0 0.0
        %1463 = vmatprep.subr.mxu0 0.0
        %1464 = vmatpush1.msra.mxu0 0.0
        %1465 = vmatprep.subr.mxu0 0.0
        %1466 = vmatpush1.msra.mxu0 0.0
        %1467 = vmatprep.subr.mxu0 0.0
        %1468 = vmatpush1.msra.mxu0 0.0
        %1469 = vmatprep.subr.mxu0 0.0
        %1470 = vmatpush1.msra.mxu0 0.0
        %1471 = vmatprep.subr.mxu0 0.0
        %1472 = vmatpush1.msra.mxu0 0.0
        %1473 = vmatprep.subr.mxu0 0.0
        %1474 = vmatpush1.msra.mxu0 0.0
        %1475 = vmatprep.subr.mxu0 0.0
        %1476 = vmatpush1.msra.mxu0 0.0
        %1477 = vmatprep.subr.mxu0 0.0
        %1478 = vmatpush1.msra.mxu0 0.0
        %1479 = vmatprep.subr.mxu0 0.0
        %1480 = vmatpush1.msra.mxu0 0.0
        %1481 = vmatprep.subr.mxu0 0.0
        %1482 = vmatpush1.msra.mxu0 0.0
        %1483 = vmatprep.subr.mxu0 0.0
        %1484 = vmatpush1.msra.mxu0 0.0
        %1485 = vmatprep.subr.mxu0 0.0
        %1486 = vmatpush1.msra.mxu0 0.0
        %1487 = vmatprep.subr.mxu0 0.0
        %1488 = vmatpush1.msra.mxu0 0.0
        %1489 = vmatprep.subr.mxu0 0.0
        %1490 = vmatpush1.msra.mxu0 0.0
        %1491 = vmatprep.subr.mxu0 0.0
        %1492 = vmatpush1.msra.mxu0 0.0
        %1493 = vmatprep.subr.mxu0 0.0
        %1494 = vmatpush1.msra.mxu0 0.0
        %1495 = vmatprep.subr.mxu0 0.0
        %1496 = vmatpush1.msra.mxu0 0.0
        %1497 = vmatprep.subr.mxu0 0.0
        %1498 = vmatpush1.msra.mxu0 0.0
        %1499 = vmatprep.subr.mxu0 0.0
        %1500 = vmatpush1.msra.mxu0 0.0
        %1501 = vmatprep.subr.mxu0 0.0
        %1502 = vmatpush1.msra.mxu0 0.0
        %1503 = vmatprep.mubr.f32.mxu0 0.0
        %1504 = vmatmul.mubr.f32.gmra.mrb[0].mxu0 %v1437
        %v1505 = vpop.f32.mrb[0].mxu0
        %v1506 = vadd.f32 0.0, %v1505
        %v1507 = vpop.f32.mrb[0].mxu0
        %1508 = vdwg.mxu0
        %v1510 = vsel %vm618, %v1506, 0
        %1512 = vmatprep.subr.mxu0 0.0
        %1513 = vmatpush1.msra.mxu0 %v614
        %1514 = vmatprep.subr.mxu0 0.0
        %1515 = vmatpush1.msra.mxu0 0.0
        %1516 = vmatprep.subr.mxu0 0.0
        %1517 = vmatpush1.msra.mxu0 0.0
        %1518 = vmatprep.subr.mxu0 0.0
        %1519 = vmatpush1.msra.mxu0 0.0
        %1520 = vmatprep.subr.mxu0 0.0
        %1521 = vmatpush1.msra.mxu0 0.0
        %1522 = vmatprep.subr.mxu0 0.0
        %1523 = vmatpush1.msra.mxu0 0.0
        %1524 = vmatprep.subr.mxu0 0.0
        %1525 = vmatpush1.msra.mxu0 0.0
        %1526 = vmatprep.subr.mxu0 0.0
        %1527 = vmatpush1.msra.mxu0 0.0
        %1528 = vmatprep.subr.mxu0 0.0
        %1529 = vmatpush1.msra.mxu0 0.0
        %1530 = vmatprep.subr.mxu0 0.0
        %1531 = vmatpush1.msra.mxu0 0.0
        %1532 = vmatprep.subr.mxu0 0.0
        %1533 = vmatpush1.msra.mxu0 0.0
        %1534 = vmatprep.subr.mxu0 0.0
        %1535 = vmatpush1.msra.mxu0 0.0
        %1536 = vmatprep.subr.mxu0 0.0
        %1537 = vmatpush1.msra.mxu0 0.0
        %1538 = vmatprep.subr.mxu0 0.0
        %1539 = vmatpush1.msra.mxu0 0.0
        %1540 = vmatprep.subr.mxu0 0.0
        %1541 = vmatpush1.msra.mxu0 0.0
        %1542 = vmatprep.subr.mxu0 0.0
        %1543 = vmatpush1.msra.mxu0 0.0
        %1544 = vmatprep.subr.mxu0 0.0
        %1545 = vmatpush1.msra.mxu0 0.0
        %1546 = vmatprep.subr.mxu0 0.0
        %1547 = vmatpush1.msra.mxu0 0.0
        %1548 = vmatprep.subr.mxu0 0.0
        %1549 = vmatpush1.msra.mxu0 0.0
        %1550 = vmatprep.subr.mxu0 0.0
        %1551 = vmatpush1.msra.mxu0 0.0
        %1552 = vmatprep.subr.mxu0 0.0
        %1553 = vmatpush1.msra.mxu0 0.0
        %1554 = vmatprep.subr.mxu0 0.0
        %1555 = vmatpush1.msra.mxu0 0.0
        %1556 = vmatprep.subr.mxu0 0.0
        %1557 = vmatpush1.msra.mxu0 0.0
        %1558 = vmatprep.subr.mxu0 0.0
        %1559 = vmatpush1.msra.mxu0 0.0
        %1560 = vmatprep.subr.mxu0 0.0
        %1561 = vmatpush1.msra.mxu0 0.0
        %1562 = vmatprep.subr.mxu0 0.0
        %1563 = vmatpush1.msra.mxu0 0.0
        %1564 = vmatprep.subr.mxu0 0.0
        %1565 = vmatpush1.msra.mxu0 0.0
        %1566 = vmatprep.subr.mxu0 0.0
        %1567 = vmatpush1.msra.mxu0 0.0
        %1568 = vmatprep.subr.mxu0 0.0
        %1569 = vmatpush1.msra.mxu0 0.0
        %1570 = vmatprep.subr.mxu0 0.0
        %1571 = vmatpush1.msra.mxu0 0.0
        %1572 = vmatprep.subr.mxu0 0.0
        %1573 = vmatpush1.msra.mxu0 0.0
        %1574 = vmatprep.subr.mxu0 0.0
        %1575 = vmatpush1.msra.mxu0 0.0
        %1576 = vmatprep.mubr.f32.mxu0 0.0
        %1577 = vmatmul.mubr.f32.gmra.mrb[0].mxu0 %v1510
        %v1578 = vpop.f32.mrb[0].mxu0
        %v1579 = vadd.f32 0.0, %v1578
        %v1580 = vpop.f32.mrb[0].mxu0
        %1581 = vdwg.mxu0
        %v1582 = vadd.f32 %v1341, %v1579
        %v1583 = vld [vmem:[%s5] sm:$0x1]
        %v1585 = vlaneseq
        %v1586 = vshrl.u32 %v1585, 7
        %v1587 = vsub.s32 0, %v1586
        %v1588 = vrot.slane %v1583, %v1587
        %v1590 = vadd.f32 %v1582, %v1588
        %v1591 = vadd.f32 %v522, %v1590
        %v1592 = vsel %vm537, %v1591, 0.0
        %1593 = vadd.xlane.f32.xlu0 %v1592
        %v1594 = vpop.xlane.xlu0 %1593
        %v1595 = vrcp.pop 32.0
        %v1596 = vmul.f32 %v1594, %v1595
        %v1597 = vsub.f32 %v1591, %v1596
        %v1598 = vmul.f32 %v1597, %v1597
        %v1599 = vsel %vm537, %v1598, 0.0
        %1600 = vadd.xlane.f32.xlu0 %v1599
        %v1601 = vpop.xlane.xlu0 %1600
        %v1602 = vmul.f32 %v1601, %v1595
        %v1603 = vadd.f32 %v1602, 1e-05
        %v1604 = vrsqrt.pop %v1603
        %v1605 = vmul.f32 %v1597, %v1604
        %v1606 = vld [vmem:[%s6] sm:$0x1]
        %v1608 = vlaneseq
        %v1609 = vshrl.u32 %v1608, 7
        %v1610 = vsub.s32 0, %v1609
        %v1611 = vrot.slane %v1606, %v1610
        %v1613 = vmul.f32 %v1605, %v1611
        %v1614 = vld [vmem:[#allocation5] sm:$0x1]
        %v1616 = vlaneseq
        %v1617 = vshrl.u32 %v1616, 7
        %v1618 = vsub.s32 0, %v1617
        %v1619 = vrot.slane %v1614, %v1618
        %v1621 = vadd.f32 %v1613, %v1619
        %v1622 = vld [vmem:[%s8] sm:$0xff]
        %v1623 = vld [vmem:[%s8 + $0x8] sm:$0xff]
        %v1624 = vld [vmem:[%s8 + $0x10] sm:$0xff]
        %v1625 = vld [vmem:[%s8 + $0x18] sm:$0xff]
        %v1626 = vld [vmem:[#allocation7] sm:$0x1]
        %v1628 = vlaneseq
        %v1629 = vshrl.u32 %v1628, 7
        %v1630 = vsub.s32 0, %v1629
        %v1631 = vrot.slane %v1626, %v1630
        %v1634 = vsel %vm537, %v1621, 0
        %1636 = vmatprep.subr.mxu0 0.0
        %1637 = vmatpush1.msra.mxu0 %v1622
        %1638 = vmatprep.subr.mxu0 0.0
        %1639 = vmatpush1.msra.mxu0 %v1623
        %1640 = vmatprep.subr.mxu0 0.0
        %1641 = vmatpush1.msra.mxu0 %v1624
        %1642 = vmatprep.subr.mxu0 0.0
        %1643 = vmatpush1.msra.mxu0 %v1625
        %1644 = vmatprep.subr.mxu0 0.0
        %1645 = vmatpush1.msra.mxu0 0.0
        %1646 = vmatprep.subr.mxu0 0.0
        %1647 = vmatpush1.msra.mxu0 0.0
        %1648 = vmatprep.subr.mxu0 0.0
        %1649 = vmatpush1.msra.mxu0 0.0
        %1650 = vmatprep.subr.mxu0 0.0
        %1651 = vmatpush1.msra.mxu0 0.0
        %1652 = vmatprep.subr.mxu0 0.0
        %1653 = vmatpush1.msra.mxu0 0.0
        %1654 = vmatprep.subr.mxu0 0.0
        %1655 = vmatpush1.msra.mxu0 0.0
        %1656 = vmatprep.subr.mxu0 0.0
        %1657 = vmatpush1.msra.mxu0 0.0
        %1658 = vmatprep.subr.mxu0 0.0
        %1659 = vmatpush1.msra.mxu0 0.0
        %1660 = vmatprep.subr.mxu0 0.0
        %1661 = vmatpush1.msra.mxu0 0.0
        %1662 = vmatprep.subr.mxu0 0.0
        %1663 = vmatpush1.msra.mxu0 0.0
        %1664 = vmatprep.subr.mxu0 0.0
        %1665 = vmatpush1.msra.mxu0 0.0
        %1666 = vmatprep.subr.mxu0 0.0
        %1667 = vmatpush1.msra.mxu0 0.0
        %1668 = vmatprep.subr.mxu0 0.0
        %1669 = vmatpush1.msra.mxu0 0.0
        %1670 = vmatprep.subr.mxu0 0.0
        %1671 = vmatpush1.msra.mxu0 0.0
        %1672 = vmatprep.subr.mxu0 0.0
        %1673 = vmatpush1.msra.mxu0 0.0
        %1674 = vmatprep.subr.mxu0 0.0
        %1675 = vmatpush1.msra.mxu0 0.0
        %1676 = vmatprep.subr.mxu0 0.0
        %1677 = vmatpush1.msra.mxu0 0.0
        %1678 = vmatprep.subr.mxu0 0.0
        %1679 = vmatpush1.msra.mxu0 0.0
        %1680 = vmatprep.subr.mxu0 0.0
        %1681 = vmatpush1.msra.mxu0 0.0
        %1682 = vmatprep.subr.mxu0 0.0
        %1683 = vmatpush1.msra.mxu0 0.0
        %1684 = vmatprep.subr.mxu0 0.0
        %1685 = vmatpush1.msra.mxu0 0.0
        %1686 = vmatprep.subr.mxu0 0.0
        %1687 = vmatpush1.msra.mxu0 0.0
        %1688 = vmatprep.subr.mxu0 0.0
        %1689 = vmatpush1.msra.mxu0 0.0
        %1690 = vmatprep.subr.mxu0 0.0
        %1691 = vmatpush1.msra.mxu0 0.0
        %1692 = vmatprep.subr.mxu0 0.0
        %1693 = vmatpush1.msra.mxu0 0.0
        %1694 = vmatprep.subr.mxu0 0.0
        %1695 = vmatpush1.msra.mxu0 0.0
        %1696 = vmatprep.subr.mxu0 0.0
        %1697 = vmatpush1.msra.mxu0 0.0
        %1698 = vmatprep.subr.mxu0 0.0
        %1699 = vmatpush1.msra.mxu0 0.0
        %1700 = vmatprep.mubr.f32.mxu0 0.0
        %1701 = vmatmul.mubr.f32.gmra.mrb[0].mxu0 %v1634
        %v1702 = vpop.f32.mrb[0].mxu0
        %v1703 = vadd.f32 %v1631, %v1702
        %v1704 = vpop.f32.mrb[0].mxu0
        %1705 = vdwg.mxu0
        %v1706 = vmax.f32 %v1703, 0.0
        %v1707 = vld [vmem:[%s10] sm:$0xff]
        %v1708 = vld [vmem:[%s10 + $0x8] sm:$0xff]
        %v1709 = vld [vmem:[%s10 + $0x10] sm:$0xff]
        %v1710 = vld [vmem:[%s10 + $0x18] sm:$0xff]
        %v1711 = vld [vmem:[%s10 + $0x20] sm:$0xff]
        %v1712 = vld [vmem:[%s10 + $0x28] sm:$0xff]
        %v1713 = vld [vmem:[%s10 + $0x30] sm:$0xff]
        %v1714 = vld [vmem:[%s10 + $0x38] sm:$0xff]
        %v1715 = vld [vmem:[%s11] sm:$0x1]
        %v1717 = vlaneseq
        %v1718 = vshrl.u32 %v1717, 7
        %v1719 = vsub.s32 0, %v1718
        %v1720 = vrot.slane %v1715, %v1719
        %vm1722 = vcmask 523264
        %v1724 = vsel %vm1722, %v1706, 0
        %1726 = vmatprep.subr.mxu0 0.0
        %1727 = vmatpush1.msra.mxu0 %v1707
        %1728 = vmatprep.subr.mxu0 0.0
        %1729 = vmatpush1.msra.mxu0 %v1708
        %1730 = vmatprep.subr.mxu0 0.0
        %1731 = vmatpush1.msra.mxu0 %v1709
        %1732 = vmatprep.subr.mxu0 0.0
        %1733 = vmatpush1.msra.mxu0 %v1710
        %1734 = vmatprep.subr.mxu0 0.0
        %1735 = vmatpush1.msra.mxu0 %v1711
        %1736 = vmatprep.subr.mxu0 0.0
        %1737 = vmatpush1.msra.mxu0 %v1712
        %1738 = vmatprep.subr.mxu0 0.0
        %1739 = vmatpush1.msra.mxu0 %v1713
        %1740 = vmatprep.subr.mxu0 0.0
        %1741 = vmatpush1.msra.mxu0 %v1714
        %1742 = vmatprep.subr.mxu0 0.0
        %1743 = vmatpush1.msra.mxu0 0.0
        %1744 = vmatprep.subr.mxu0 0.0
        %1745 = vmatpush1.msra.mxu0 0.0
        %1746 = vmatprep.subr.mxu0 0.0
        %1747 = vmatpush1.msra.mxu0 0.0
        %1748 = vmatprep.subr.mxu0 0.0
        %1749 = vmatpush1.msra.mxu0 0.0
        %1750 = vmatprep.subr.mxu0 0.0
        %1751 = vmatpush1.msra.mxu0 0.0
        %1752 = vmatprep.subr.mxu0 0.0
        %1753 = vmatpush1.msra.mxu0 0.0
        %1754 = vmatprep.subr.mxu0 0.0
        %1755 = vmatpush1.msra.mxu0 0.0
        %1756 = vmatprep.subr.mxu0 0.0
        %1757 = vmatpush1.msra.mxu0 0.0
        %1758 = vmatprep.subr.mxu0 0.0
        %1759 = vmatpush1.msra.mxu0 0.0
        %1760 = vmatprep.subr.mxu0 0.0
        %1761 = vmatpush1.msra.mxu0 0.0
        %1762 = vmatprep.subr.mxu0 0.0
        %1763 = vmatpush1.msra.mxu0 0.0
        %1764 = vmatprep.subr.mxu0 0.0
        %1765 = vmatpush1.msra.mxu0 0.0
        %1766 = vmatprep.subr.mxu0 0.0
        %1767 = vmatpush1.msra.mxu0 0.0
        %1768 = vmatprep.subr.mxu0 0.0
        %1769 = vmatpush1.msra.mxu0 0.0
        %1770 = vmatprep.subr.mxu0 0.0
        %1771 = vmatpush1.msra.mxu0 0.0
        %1772 = vmatprep.subr.mxu0 0.0
        %1773 = vmatpush1.msra.mxu0 0.0
        %1774 = vmatprep.subr.mxu0 0.0
        %1775 = vmatpush1.msra.mxu0 0.0
        %1776 = vmatprep.subr.mxu0 0.0
        %1777 = vmatpush1.msra.mxu0 0.0
        %1778 = vmatprep.subr.mxu0 0.0
        %1779 = vmatpush1.msra.mxu0 0.0
        %1780 = vmatprep.subr.mxu0 0.0
        %1781 = vmatpush1.msra.mxu0 0.0
        %1782 = vmatprep.subr.mxu0 0.0
        %1783 = vmatpush1.msra.mxu0 0.0
        %1784 = vmatprep.subr.mxu0 0.0
        %1785 = vmatpush1.msra.mxu0 0.0
        %1786 = vmatprep.subr.mxu0 0.0
        %1787 = vmatpush1.msra.mxu0 0.0
        %1788 = vmatprep.subr.mxu0 0.0
        %1789 = vmatpush1.msra.mxu0 0.0
        %1790 = vmatprep.mubr.f32.mxu0 0.0
        %1791 = vmatmul.mubr.f32.gmra.mrb[0].mxu0 %v1724
        %v1792 = vpop.f32.mrb[0].mxu0
        %v1793 = vadd.f32 %v1720, %v1792
        %v1794 = vpop.f32.mrb[0].mxu0
        %1795 = vdwg.mxu0
        %v1796 = vadd.f32 %v1621, %v1793
        %v1797 = vsel %vm537, %v1796, 0.0
        %1798 = vadd.xlane.f32.xlu0 %v1797
        %v1799 = vpop.xlane.xlu0 %1798
        %v1800 = vmul.f32 %v1799, %v1595
        %v1801 = vsub.f32 %v1796, %v1800
        %v1802 = vmul.f32 %v1801, %v1801
        %v1803 = vsel %vm537, %v1802, 0.0
        %1804 = vadd.xlane.f32.xlu0 %v1803
        %v1805 = vpop.xlane.xlu0 %1804
        %v1806 = vmul.f32 %v1805, %v1595
        %v1807 = vadd.f32 %v1806, 1e-05
        %v1808 = vrsqrt.pop %v1807
        %v1809 = vmul.f32 %v1801, %v1808
        %v1810 = vld [vmem:[%s12] sm:$0x1]
        %v1812 = vlaneseq
        %v1813 = vshrl.u32 %v1812, 7
        %v1814 = vsub.s32 0, %v1813
        %v1815 = vrot.slane %v1810, %v1814
        %v1817 = vmul.f32 %v1809, %v1815
        %v1818 = vld [vmem:[%s13] sm:$0x1]
        %v1820 = vlaneseq
        %v1821 = vshrl.u32 %v1820, 7
        %v1822 = vsub.s32 0, %v1821
        %v1823 = vrot.slane %v1818, %v1822
        %v1825 = vadd.f32 %v1817, %v1823
        %1826 = vst.msk [vmem:[%s518] sm:$0xff] %vm537, %v1825
        %s1827 = sand.u32 %s344, 1
        %s1828 = scalar_lea.sflag [#allocation4], %s1827
        %s1829 = sand.u32 %s344, 1
        %s1830 = smul.addr %s1829, 8
        %s1831 = scalar_lea.vmem [#allocation8], %s1830
        // Predicated region
        $region89: #{tpu_custom_call.1} parent=75 // pred_check
          %p1832 = pneg %p354
        $region90: #{tpu_custom_call.1} parent=75 // pred_check_branch
          %1834 = sbr.rel (%p1832) target = $region92
        $region91: #{tpu_custom_call.1} parent=75 // pred_region
          %s1836 = ssub.s32 128, 128
          %1837 = vsyncadd %s1828, %s1836
          %s1838 = smul.addr %s32, 128
          %s1839 = scalar_lea.hbm %s14, %s1838
          %s1841 = sshll.u32 %s1831, 4
          %s1842 = int_to_ptr.vmem [resolvable:$true] %s1841
          %1844 = dma.vmem_to_hbm [thread:$0]  %s1842, 128, %s1839, %s1828
        $region92: #{tpu_custom_call.1} parent=75 // pred_fallthru
          _
      $region76: #{tpu_custom_call.1} parent=5 // pred_fallthru
        _
      %p1845 = scmp.le.s32.totalorder 2, %s27
      // Predicated region
      $region93: #{tpu_custom_call.1} parent=5 // pred_check
        %p1846 = pneg %p1845
      $region94: #{tpu_custom_call.1} parent=5 // pred_check_branch
        %1848 = sbr.rel (%p1846) target = $region96
      $region95: #{tpu_custom_call.1} parent=5 // pred_region
        %s1849 = ssub.s32 %s27, 2
        // Predicated region
        $region97: #{tpu_custom_call.1} parent=95 // pred_check
          %p1850 = pneg %p360
        $region98: #{tpu_custom_call.1} parent=95 // pred_check_branch
          %1852 = sbr.rel (%p1850) target = $region100
        $region99: #{tpu_custom_call.1} parent=95 // pred_region
          %s1853 = sand.u32 %s345, 1
          %s1854 = scalar_lea.sflag [#allocation4], %s1853
          %s1855 = sand.u32 %s345, 1
          %s1856 = smul.addr %s1855, 8
          %s1857 = scalar_lea.vmem [#allocation8], %s1856
          %1858 = dma.done %s1854, 128
        $region100: #{tpu_custom_call.1} parent=95 // pred_fallthru
          _
      $region96: #{tpu_custom_call.1} parent=5 // pred_fallthru
        _
    $region6: #{tpu_custom_call.1} parent=1 // loop_footer
      %s31 = sadd.s32 1, %s27
    $region7: #{tpu_custom_call.1} parent=1 // loop_footer_branch
      %26 = sbr.rel target = $region3
    $region8: #{tpu_custom_call.1} parent=1 // loop_exit
      _
    %1859 = vsyncpa [#allocation3], 1
    %s1860 = scalar_lea.sflag [#allocation3], 1
    %1861 = vsyncpa %s1860, 1
    %1862 = vsyncpa [#allocation6], 1
    %1863 = vsyncpa [#allocation4], 1
    %s1864 = scalar_lea.sflag [#allocation4], 1
    %1865 = vsyncpa %s1864, 1

</llo_original>
